<compile_context>
chip_gen: v7x
topology: tpu7x:2x2x1
jax: 0.10.0
libtpu: 0.0.40
codegen_flags: <defaults>
</compile_context>

<pallas_src>
import functools

import jax
import jax.numpy as jnp
from jax import lax
from jax.experimental import pallas as pl
from jax.experimental.pallas import tpu as pltpu


def _round_up(v, m):
    return ((v + m - 1) // m) * m


def _coord_conv_kernel(x_ref, w_ref, b_ref, o_ref, xaug_ref, *,
                       h, w, pad, kh, kw, wp, npad, nout,
                       c_out, c_aug_pad, with_r):
    # x_ref   : (C_aug_pad, NPAD)  spatially zero-padded, flattened image;
    #                              coord rows (0..n_coord-1) and pad rows are 0
    # w_ref   : (kh*kw, C_out, C_aug_pad)  per-tap weight slabs
    # b_ref   : (C_out, 1)
    # o_ref   : (C_out, NOUT)      NOUT = H_out * Wp (lane-dense)
    # xaug_ref: VMEM scratch (C_aug_pad, NPAD)

    # ---- coordinate channels generated in-kernel (pure VPU work) ----
    q = lax.broadcasted_iota(jnp.int32, (c_aug_pad, npad), 1).astype(jnp.float32)
    # padded-grid row/col indices without integer division (exact for small q)
    yq = jnp.floor((q + 0.5) * (1.0 / wp))
    xq = q - yq * wp
    yi = yq - pad                      # un-padded row index, valid in [0, h)
    xi = xq - pad                      # un-padded col index, valid in [0, w)
    interior = (yi >= 0.0) & (yi <= h - 1.0) & (xi >= 0.0) & (xi <= w - 1.0)
    yc = jnp.where(interior, 2.0 * yi / (h - 1.0) - 1.0, 0.0)
    xc = jnp.where(interior, 2.0 * xi / (w - 1.0) - 1.0, 0.0)
    row = lax.broadcasted_iota(jnp.int32, (c_aug_pad, npad), 0)
    if with_r:
        r = jnp.sqrt(yc * yc + xc * xc)
        r = jnp.where(interior, r, 0.0)
        r = r / jnp.max(r, keepdims=True)
        coords = jnp.where(row == 0, yc,
                 jnp.where(row == 1, xc,
                 jnp.where(row == 2, r, 0.0)))
    else:
        coords = jnp.where(row == 0, yc, jnp.where(row == 1, xc, 0.0))

    # augmented + spatially-padded + flattened input, channels on sublanes
    xaug_ref[...] = x_ref[...] + coords

    # ---- conv: kh*kw accumulated matmuls over lane-shifted windows ----
    acc = jnp.zeros((c_out, nout), jnp.float32)
    for i in range(kh):
        for j in range(kw):
            t = i * kw + j
            off = i * wp + j
            a_t = xaug_ref[:, off:off + nout]            # (C_aug_pad, NOUT)
            acc = acc + jnp.dot(w_ref[t], a_t,
                                preferred_element_type=jnp.float32)
    o_ref[...] = acc + b_ref[...]                        # f32 epilogue (v5e-safe)


def coord_conv(x, weight, bias, *, stride=1, padding=1, with_r=True):
    """CoordConv forward. x: (N, C_in, H, W); weight: (C_out, C_in+2(+1), kH, kW)."""
    if stride != 1:
        # TODO(synk): strided CoordConv is not implemented in the fused kernel.
        raise NotImplementedError("fused CoordConv kernel supports stride=1 only")
    n, c_in, h, w = x.shape
    c_out, c_aug_w, kh, kw = weight.shape
    n_coord = 3 if with_r else 2
    c_aug = c_in + n_coord
    assert c_aug_w == c_aug
    c_aug_pad = _round_up(c_aug, 8)
    hp, wp = h + 2 * padding, w + 2 * padding
    h_out = hp - kh + 1
    w_out = wp - kw + 1
    nout = h_out * wp                                   # flattened output lanes
    npad = _round_up((kh - 1) * wp + (kw - 1) + nout, 128)

    # ---- tiny host-side repack (no im2col, no transposes, no batch bcast) ----
    x_sp = jnp.pad(x.astype(jnp.float32),
                   ((0, 0), (0, 0), (padding, padding), (padding, padding)))
    x_sp = x_sp.reshape(n, c_in, hp * wp)
    x_in = jnp.pad(x_sp, ((0, 0),
                          (n_coord, c_aug_pad - n_coord - c_in),
                          (0, npad - hp * wp)))          # (N, C_aug_pad, NPAD)

    # weight (C_out, C_aug, kh, kw) -> (kh*kw, C_out, C_aug_pad), channel-padded
    w_taps = jnp.transpose(weight.astype(jnp.float32), (2, 3, 0, 1))
    w_taps = w_taps.reshape(kh * kw, c_out, c_aug)
    w_taps = jnp.pad(w_taps, ((0, 0), (0, 0), (0, c_aug_pad - c_aug)))
    b_col = bias.astype(jnp.float32).reshape(c_out, 1)

    kernel = functools.partial(
        _coord_conv_kernel, h=h, w=w, pad=padding, kh=kh, kw=kw, wp=wp,
        npad=npad, nout=nout, c_out=c_out, c_aug_pad=c_aug_pad, with_r=with_r)

    flops = 2 * n * (kh * kw * c_aug_pad) * c_out * nout
    bytes_accessed = 4 * (x_in.size + w_taps.size + b_col.size
                          + n * c_out * nout)

    out = pl.pallas_call(
        kernel,
        out_shape=jax.ShapeDtypeStruct((n, c_out, nout), jnp.float32),
        grid_spec=pltpu.PrefetchScalarGridSpec(
            num_scalar_prefetch=0,
            grid=(n,),
            in_specs=[
                pl.BlockSpec((None, c_aug_pad, npad), lambda nb: (nb, 0, 0)),
                pl.BlockSpec((kh * kw, c_out, c_aug_pad), lambda nb: (0, 0, 0)),
                pl.BlockSpec((c_out, 1), lambda nb: (0, 0)),
            ],
            out_specs=pl.BlockSpec((None, c_out, nout), lambda nb: (nb, 0, 0)),
            scratch_shapes=[pltpu.VMEM((c_aug_pad, npad), jnp.float32)],
        ),
        compiler_params=pltpu.CompilerParams(
            dimension_semantics=("parallel",)),
        cost_estimate=pl.CostEstimate(
            flops=flops, transcendentals=n * npad,
            bytes_accessed=bytes_accessed),
    )(x_in, w_taps, b_col)

    # (N, C_out, H_out*Wp) -> NCHW, dropping the Wp-padding junk columns
    out = out.reshape(n, c_out, h_out, wp)[..., :w_out]
    return out


if __name__ == "__main__":
    # CoordConv(in_channels=4, out_channels=8, kernel_size=3, stride=1,
    #           padding=1, with_r=True)
    N, C_IN, H, W = 2, 4, 16, 16
    C_OUT, KH, KW = 8, 3, 3
    WITH_R = True
    C_AUG = C_IN + (3 if WITH_R else 2)

    key = jax.random.PRNGKey(0)
    kx, kw_, kb = jax.random.split(key, 3)
    x = jax.random.normal(kx, (N, C_IN, H, W), dtype=jnp.float32)
    fan_in = C_AUG * KH * KW
    bound = 1.0 / (fan_in ** 0.5)
    weight = jax.random.uniform(kw_, (C_OUT, C_AUG, KH, KW),
                                minval=-bound, maxval=bound, dtype=jnp.float32)
    bias = jax.random.uniform(kb, (C_OUT,), minval=-bound, maxval=bound,
                              dtype=jnp.float32)

    fwd = jax.jit(functools.partial(coord_conv, stride=1, padding=1,
                                    with_r=WITH_R))
    out = jax.block_until_ready(fwd(x, weight, bias))

    # pure-JAX reference: AddCoordinates + Conv2d (NCHW, padding=1)
    y = 2.0 * jnp.arange(H, dtype=jnp.float32)[:, None] / (H - 1.0) - 1.0
    y = jnp.broadcast_to(y, (H, W))
    xx = 2.0 * jnp.arange(W, dtype=jnp.float32)[None, :] / (W - 1.0) - 1.0
    xx = jnp.broadcast_to(xx, (H, W))
    coords = jnp.stack([y, xx], axis=0)
    if WITH_R:
        r = jnp.sqrt(y ** 2 + xx ** 2)
        r = r / jnp.max(r)
        coords = jnp.concatenate([coords, r[None]], axis=0)
    x_aug = jnp.concatenate(
        [jnp.broadcast_to(coords[None], (N,) + coords.shape), x], axis=1)
    ref = jax.lax.conv_general_dilated(
        x_aug, weight, (1, 1), ((1, 1), (1, 1)),
        dimension_numbers=("NCHW", "OIHW", "NCHW"),
        precision=jax.lax.Precision.HIGHEST) + bias[None, :, None, None]

    assert out.shape == (N, C_OUT, H, W), out.shape
    assert jnp.allclose(out, ref, atol=5e-4, rtol=5e-4), (
        float(jnp.max(jnp.abs(out - ref))))

    print("KERNEL_OK")
</pallas_src>

<mosaic_0001>
module attributes {stable_mosaic.version = 11 : i64} {
  func.func @_coord_conv_kernel(%arg0: i32, %arg1: memref<1x8x384xf32, #tpu.memory_space<vmem>>, %arg2: memref<9x8x8xf32, #tpu.memory_space<vmem>>, %arg3: memref<8x1xf32, #tpu.memory_space<vmem>>, %arg4: memref<1x8x288xf32, #tpu.memory_space<vmem>>, %arg5: memref<8x384xf32, #tpu.memory_space<vmem>>) attributes {dimension_semantics = [#tpu.dimension_semantics<parallel>], iteration_bounds = array<i64: 2>, scalar_prefetch = 0 : i64, scratch_operands = 1 : i64, tpu.core_type = #tpu.core_type<tc>, window_params = [{transform_indices = @transform_0, window_bounds = array<i64: 1, 8, 384>}, {pipeline_mode = #tpu.pipeline_mode<synchronous>, transform_indices = @transform_1, window_bounds = array<i64: 9, 8, 8>}, {pipeline_mode = #tpu.pipeline_mode<synchronous>, transform_indices = @transform_2, window_bounds = array<i64: 8, 1>}, {transform_indices = @transform_3, window_bounds = array<i64: 1, 8, 288>}]} {
    %0 = tpu.iota {dimensions = array<i32: 1>} : vector<8x384xi32>
    %1 = arith.sitofp %0 : vector<8x384xi32> to vector<8x384xf32>
    %cst = arith.constant 5.000000e-01 : f32
    %2 = vector.broadcast %cst : f32 to vector<8x384xf32>
    %3 = arith.addf %1, %2 : vector<8x384xf32>
    %cst_0 = arith.constant 0.055555556 : f32
    %4 = vector.broadcast %cst_0 : f32 to vector<8x384xf32>
    %5 = arith.mulf %3, %4 : vector<8x384xf32>
    %6 = math.floor %5 : vector<8x384xf32>
    %cst_1 = arith.constant 1.800000e+01 : f32
    %7 = vector.broadcast %cst_1 : f32 to vector<8x384xf32>
    %8 = arith.mulf %6, %7 : vector<8x384xf32>
    %9 = arith.subf %1, %8 : vector<8x384xf32>
    %cst_2 = arith.constant 1.000000e+00 : f32
    %10 = vector.broadcast %cst_2 : f32 to vector<8x384xf32>
    %11 = arith.subf %6, %10 : vector<8x384xf32>
    %cst_3 = arith.constant 1.000000e+00 : f32
    %12 = vector.broadcast %cst_3 : f32 to vector<8x384xf32>
    %13 = arith.subf %9, %12 : vector<8x384xf32>
    %cst_4 = arith.constant 0.000000e+00 : f32
    %14 = vector.broadcast %cst_4 : f32 to vector<8x384xf32>
    %15 = arith.cmpf oge, %11, %14 : vector<8x384xf32>
    %cst_5 = arith.constant 1.500000e+01 : f32
    %16 = vector.broadcast %cst_5 : f32 to vector<8x384xf32>
    %17 = arith.cmpf ole, %11, %16 : vector<8x384xf32>
    %18 = arith.andi %15, %17 : vector<8x384xi1>
    %cst_6 = arith.constant 0.000000e+00 : f32
    %19 = vector.broadcast %cst_6 : f32 to vector<8x384xf32>
    %20 = arith.cmpf oge, %13, %19 : vector<8x384xf32>
    %21 = arith.andi %18, %20 : vector<8x384xi1>
    %cst_7 = arith.constant 1.500000e+01 : f32
    %22 = vector.broadcast %cst_7 : f32 to vector<8x384xf32>
    %23 = arith.cmpf ole, %13, %22 : vector<8x384xf32>
    %24 = arith.andi %21, %23 : vector<8x384xi1>
    %cst_8 = arith.constant 2.000000e+00 : f32
    %25 = vector.broadcast %cst_8 : f32 to vector<8x384xf32>
    %26 = arith.mulf %25, %11 : vector<8x384xf32>
    %cst_9 = arith.constant 1.500000e+01 : f32
    %27 = vector.broadcast %cst_9 : f32 to vector<8x384xf32>
    %28 = arith.divf %26, %27 : vector<8x384xf32>
    %cst_10 = arith.constant 1.000000e+00 : f32
    %29 = vector.broadcast %cst_10 : f32 to vector<8x384xf32>
    %30 = arith.subf %28, %29 : vector<8x384xf32>
    %cst_11 = arith.constant 0.000000e+00 : f32
    %31 = vector.broadcast %cst_11 : f32 to vector<8x384xf32>
    %32 = arith.select %24, %30, %31 : vector<8x384xi1>, vector<8x384xf32>
    %cst_12 = arith.constant 2.000000e+00 : f32
    %33 = vector.broadcast %cst_12 : f32 to vector<8x384xf32>
    %34 = arith.mulf %33, %13 : vector<8x384xf32>
    %cst_13 = arith.constant 1.500000e+01 : f32
    %35 = vector.broadcast %cst_13 : f32 to vector<8x384xf32>
    %36 = arith.divf %34, %35 : vector<8x384xf32>
    %cst_14 = arith.constant 1.000000e+00 : f32
    %37 = vector.broadcast %cst_14 : f32 to vector<8x384xf32>
    %38 = arith.subf %36, %37 : vector<8x384xf32>
    %cst_15 = arith.constant 0.000000e+00 : f32
    %39 = vector.broadcast %cst_15 : f32 to vector<8x384xf32>
    %40 = arith.select %24, %38, %39 : vector<8x384xi1>, vector<8x384xf32>
    %41 = tpu.iota {dimensions = array<i32: 0>} : vector<8x384xi32>
    %42 = arith.mulf %32, %32 : vector<8x384xf32>
    %43 = arith.mulf %40, %40 : vector<8x384xf32>
    %44 = arith.addf %42, %43 : vector<8x384xf32>
    %45 = math.sqrt %44 : vector<8x384xf32>
    %cst_16 = arith.constant 0.000000e+00 : f32
    %46 = vector.broadcast %cst_16 : f32 to vector<8x384xf32>
    %47 = arith.select %24, %45, %46 : vector<8x384xi1>, vector<8x384xf32>
    %48 = vector.shape_cast %47 : vector<8x384xf32> to vector<1x8x384xf32>
    %cst_17 = arith.constant dense<0xFF800000> : vector<1xf32>
    %49 = vector.multi_reduction <maximumf>, %48, %cst_17 [1, 2] : vector<1x8x384xf32> to vector<1xf32>
    %50 = vector.shape_cast %49 : vector<1xf32> to vector<1x1x1xf32>
    %51 = vector.extract %50[0, 0, 0] : f32 from vector<1x1x1xf32>
    %52 = vector.broadcast %51 : f32 to vector<1x1xf32>
    %53 = vector.broadcast %52 : vector<1x1xf32> to vector<8x384xf32>
    %54 = arith.divf %47, %53 : vector<8x384xf32>
    %c0_i32 = arith.constant 0 : i32
    %55 = vector.broadcast %c0_i32 : i32 to vector<8x384xi32>
    %56 = arith.cmpi eq, %41, %55 : vector<8x384xi32>
    %c1_i32 = arith.constant 1 : i32
    %57 = vector.broadcast %c1_i32 : i32 to vector<8x384xi32>
    %58 = arith.cmpi eq, %41, %57 : vector<8x384xi32>
    %c2_i32 = arith.constant 2 : i32
    %59 = vector.broadcast %c2_i32 : i32 to vector<8x384xi32>
    %60 = arith.cmpi eq, %41, %59 : vector<8x384xi32>
    %cst_18 = arith.constant 0.000000e+00 : f32
    %61 = vector.broadcast %cst_18 : f32 to vector<8x384xf32>
    %62 = arith.select %60, %54, %61 : vector<8x384xi1>, vector<8x384xf32>
    %63 = arith.select %58, %40, %62 : vector<8x384xi1>, vector<8x384xf32>
    %64 = arith.select %56, %32, %63 : vector<8x384xi1>, vector<8x384xf32>
    %c0 = arith.constant 0 : index
    %c0_19 = arith.constant 0 : index
    %c0_20 = arith.constant 0 : index
    %65 = vector.load %arg1[%c0, %c0_19, %c0_20] : memref<1x8x384xf32, #tpu.memory_space<vmem>>, vector<1x8x384xf32>
    %66 = vector.shape_cast %65 : vector<1x8x384xf32> to vector<8x384xf32>
    %67 = arith.addf %66, %64 : vector<8x384xf32>
    %c0_21 = arith.constant 0 : index
    %c0_22 = arith.constant 0 : index
    %68 = vector.load %arg5[%c0_21, %c0_22] : memref<8x384xf32, #tpu.memory_space<vmem>>, vector<8x384xf32>
    tpu.vector_store %arg5[%c0_21, %c0_22], %67 {strides = array<i32>} : memref<8x384xf32, #tpu.memory_space<vmem>>, vector<8x384xf32>,
    %cst_23 = arith.constant 0.000000e+00 : f32
    %69 = vector.broadcast %cst_23 : f32 to vector<8x288xf32>
    %c0_24 = arith.constant 0 : index
    %c0_25 = arith.constant 0 : index
    %70 = vector.load %arg5[%c0_24, %c0_25] : memref<8x384xf32, #tpu.memory_space<vmem>>, vector<8x288xf32>
    %c0_26 = arith.constant 0 : index
    %c0_27 = arith.constant 0 : index
    %c0_28 = arith.constant 0 : index
    %71 = vector.load %arg2[%c0_26, %c0_27, %c0_28] : memref<9x8x8xf32, #tpu.memory_space<vmem>>, vector<1x8x8xf32>
    %72 = vector.shape_cast %71 : vector<1x8x8xf32> to vector<8x8xf32>
    %cst_29 = arith.constant dense<0.000000e+00> : vector<8x288xf32>
    %73 = tpu.matmul %72, %70, %cst_29 {dimension_numbers = #tpu.dot_dimension_numbers<[1], [0], [0], [1], [0, 0, 1, 1], [], []>} : vector<8x8xf32>, vector<8x288xf32>, vector<8x288xf32> -> vector<8x288xf32>
    %74 = arith.addf %69, %73 : vector<8x288xf32>
    %c0_30 = arith.constant 0 : index
    %c1 = arith.constant 1 : index
    %75 = vector.load %arg5[%c0_30, %c1] : memref<8x384xf32, #tpu.memory_space<vmem>>, vector<8x288xf32>
    %c1_31 = arith.constant 1 : index
    %c0_32 = arith.constant 0 : index
    %c0_33 = arith.constant 0 : index
    %76 = vector.load %arg2[%c1_31, %c0_32, %c0_33] : memref<9x8x8xf32, #tpu.memory_space<vmem>>, vector<1x8x8xf32>
    %77 = vector.shape_cast %76 : vector<1x8x8xf32> to vector<8x8xf32>
    %cst_34 = arith.constant dense<0.000000e+00> : vector<8x288xf32>
    %78 = tpu.matmul %77, %75, %cst_34 {dimension_numbers = #tpu.dot_dimension_numbers<[1], [0], [0], [1], [0, 0, 1, 1], [], []>} : vector<8x8xf32>, vector<8x288xf32>, vector<8x288xf32> -> vector<8x288xf32>
    %79 = arith.addf %74, %78 : vector<8x288xf32>
    %c0_35 = arith.constant 0 : index
    %c2 = arith.constant 2 : index
    %80 = vector.load %arg5[%c0_35, %c2] : memref<8x384xf32, #tpu.memory_space<vmem>>, vector<8x288xf32>
    %c2_36 = arith.constant 2 : index
    %c0_37 = arith.constant 0 : index
    %c0_38 = arith.constant 0 : index
    %81 = vector.load %arg2[%c2_36, %c0_37, %c0_38] : memref<9x8x8xf32, #tpu.memory_space<vmem>>, vector<1x8x8xf32>
    %82 = vector.shape_cast %81 : vector<1x8x8xf32> to vector<8x8xf32>
    %cst_39 = arith.constant dense<0.000000e+00> : vector<8x288xf32>
    %83 = tpu.matmul %82, %80, %cst_39 {dimension_numbers = #tpu.dot_dimension_numbers<[1], [0], [0], [1], [0, 0, 1, 1], [], []>} : vector<8x8xf32>, vector<8x288xf32>, vector<8x288xf32> -> vector<8x288xf32>
    %84 = arith.addf %79, %83 : vector<8x288xf32>
    %c0_40 = arith.constant 0 : index
    %c18 = arith.constant 18 : index
    %85 = vector.load %arg5[%c0_40, %c18] : memref<8x384xf32, #tpu.memory_space<vmem>>, vector<8x288xf32>
    %c3 = arith.constant 3 : index
    %c0_41 = arith.constant 0 : index
    %c0_42 = arith.constant 0 : index
    %86 = vector.load %arg2[%c3, %c0_41, %c0_42] : memref<9x8x8xf32, #tpu.memory_space<vmem>>, vector<1x8x8xf32>
    %87 = vector.shape_cast %86 : vector<1x8x8xf32> to vector<8x8xf32>
    %cst_43 = arith.constant dense<0.000000e+00> : vector<8x288xf32>
    %88 = tpu.matmul %87, %85, %cst_43 {dimension_numbers = #tpu.dot_dimension_numbers<[1], [0], [0], [1], [0, 0, 1, 1], [], []>} : vector<8x8xf32>, vector<8x288xf32>, vector<8x288xf32> -> vector<8x288xf32>
    %89 = arith.addf %84, %88 : vector<8x288xf32>
    %c0_44 = arith.constant 0 : index
    %c19 = arith.constant 19 : index
    %90 = vector.load %arg5[%c0_44, %c19] : memref<8x384xf32, #tpu.memory_space<vmem>>, vector<8x288xf32>
    %c4 = arith.constant 4 : index
    %c0_45 = arith.constant 0 : index
    %c0_46 = arith.constant 0 : index
    %91 = vector.load %arg2[%c4, %c0_45, %c0_46] : memref<9x8x8xf32, #tpu.memory_space<vmem>>, vector<1x8x8xf32>
    %92 = vector.shape_cast %91 : vector<1x8x8xf32> to vector<8x8xf32>
    %cst_47 = arith.constant dense<0.000000e+00> : vector<8x288xf32>
    %93 = tpu.matmul %92, %90, %cst_47 {dimension_numbers = #tpu.dot_dimension_numbers<[1], [0], [0], [1], [0, 0, 1, 1], [], []>} : vector<8x8xf32>, vector<8x288xf32>, vector<8x288xf32> -> vector<8x288xf32>
    %94 = arith.addf %89, %93 : vector<8x288xf32>
    %c0_48 = arith.constant 0 : index
    %c20 = arith.constant 20 : index
    %95 = vector.load %arg5[%c0_48, %c20] : memref<8x384xf32, #tpu.memory_space<vmem>>, vector<8x288xf32>
    %c5 = arith.constant 5 : index
    %c0_49 = arith.constant 0 : index
    %c0_50 = arith.constant 0 : index
    %96 = vector.load %arg2[%c5, %c0_49, %c0_50] : memref<9x8x8xf32, #tpu.memory_space<vmem>>, vector<1x8x8xf32>
    %97 = vector.shape_cast %96 : vector<1x8x8xf32> to vector<8x8xf32>
    %cst_51 = arith.constant dense<0.000000e+00> : vector<8x288xf32>
    %98 = tpu.matmul %97, %95, %cst_51 {dimension_numbers = #tpu.dot_dimension_numbers<[1], [0], [0], [1], [0, 0, 1, 1], [], []>} : vector<8x8xf32>, vector<8x288xf32>, vector<8x288xf32> -> vector<8x288xf32>
    %99 = arith.addf %94, %98 : vector<8x288xf32>
    %c0_52 = arith.constant 0 : index
    %c36 = arith.constant 36 : index
    %100 = vector.load %arg5[%c0_52, %c36] : memref<8x384xf32, #tpu.memory_space<vmem>>, vector<8x288xf32>
    %c6 = arith.constant 6 : index
    %c0_53 = arith.constant 0 : index
    %c0_54 = arith.constant 0 : index
    %101 = vector.load %arg2[%c6, %c0_53, %c0_54] : memref<9x8x8xf32, #tpu.memory_space<vmem>>, vector<1x8x8xf32>
    %102 = vector.shape_cast %101 : vector<1x8x8xf32> to vector<8x8xf32>
    %cst_55 = arith.constant dense<0.000000e+00> : vector<8x288xf32>
    %103 = tpu.matmul %102, %100, %cst_55 {dimension_numbers = #tpu.dot_dimension_numbers<[1], [0], [0], [1], [0, 0, 1, 1], [], []>} : vector<8x8xf32>, vector<8x288xf32>, vector<8x288xf32> -> vector<8x288xf32>
    %104 = arith.addf %99, %103 : vector<8x288xf32>
    %c0_56 = arith.constant 0 : index
    %c37 = arith.constant 37 : index
    %105 = vector.load %arg5[%c0_56, %c37] : memref<8x384xf32, #tpu.memory_space<vmem>>, vector<8x288xf32>
    %c7 = arith.constant 7 : index
    %c0_57 = arith.constant 0 : index
    %c0_58 = arith.constant 0 : index
    %106 = vector.load %arg2[%c7, %c0_57, %c0_58] : memref<9x8x8xf32, #tpu.memory_space<vmem>>, vector<1x8x8xf32>
    %107 = vector.shape_cast %106 : vector<1x8x8xf32> to vector<8x8xf32>
    %cst_59 = arith.constant dense<0.000000e+00> : vector<8x288xf32>
    %108 = tpu.matmul %107, %105, %cst_59 {dimension_numbers = #tpu.dot_dimension_numbers<[1], [0], [0], [1], [0, 0, 1, 1], [], []>} : vector<8x8xf32>, vector<8x288xf32>, vector<8x288xf32> -> vector<8x288xf32>
    %109 = arith.addf %104, %108 : vector<8x288xf32>
    %c0_60 = arith.constant 0 : index
    %c38 = arith.constant 38 : index
    %110 = vector.load %arg5[%c0_60, %c38] : memref<8x384xf32, #tpu.memory_space<vmem>>, vector<8x288xf32>
    %c8 = arith.constant 8 : index
    %c0_61 = arith.constant 0 : index
    %c0_62 = arith.constant 0 : index
    %111 = vector.load %arg2[%c8, %c0_61, %c0_62] : memref<9x8x8xf32, #tpu.memory_space<vmem>>, vector<1x8x8xf32>
    %112 = vector.shape_cast %111 : vector<1x8x8xf32> to vector<8x8xf32>
    %cst_63 = arith.constant dense<0.000000e+00> : vector<8x288xf32>
    %113 = tpu.matmul %112, %110, %cst_63 {dimension_numbers = #tpu.dot_dimension_numbers<[1], [0], [0], [1], [0, 0, 1, 1], [], []>} : vector<8x8xf32>, vector<8x288xf32>, vector<8x288xf32> -> vector<8x288xf32>
    %114 = arith.addf %109, %113 : vector<8x288xf32>
    %c0_64 = arith.constant 0 : index
    %c0_65 = arith.constant 0 : index
    %115 = vector.load %arg3[%c0_64, %c0_65] : memref<8x1xf32, #tpu.memory_space<vmem>>, vector<8x1xf32>
    %116 = vector.broadcast %115 : vector<8x1xf32> to vector<8x288xf32>
    %117 = arith.addf %114, %116 : vector<8x288xf32>
    %c0_66 = arith.constant 0 : index
    %c0_67 = arith.constant 0 : index
    %c0_68 = arith.constant 0 : index
    %118 = vector.load %arg4[%c0_66, %c0_67, %c0_68] : memref<1x8x288xf32, #tpu.memory_space<vmem>>, vector<1x8x288xf32>
    %119 = vector.shape_cast %118 : vector<1x8x288xf32> to vector<8x288xf32>
    %120 = vector.shape_cast %117 : vector<8x288xf32> to vector<1x8x288xf32>
    tpu.vector_store %arg4[%c0_66, %c0_67, %c0_68], %120 {strides = array<i32>} : memref<1x8x288xf32, #tpu.memory_space<vmem>>, vector<1x8x288xf32>,
    return
  }
  func.func @transform_0(%arg0: i32) -> (i32, i32, i32) {
    %c0_i32 = arith.constant 0 : i32
    %c0_i32_0 = arith.constant 0 : i32
    %c0_i32_1 = arith.constant 0 : i32
    return %arg0, %c0_i32, %c0_i32_0 : i32, i32, i32
  }
  func.func @transform_1(%arg0: i32) -> (i32, i32, i32) {
    %c0_i32 = arith.constant 0 : i32
    %c0_i32_0 = arith.constant 0 : i32
    %c0_i32_1 = arith.constant 0 : i32
    %c0_i32_2 = arith.constant 0 : i32
    return %c0_i32, %c0_i32_0, %c0_i32_1 : i32, i32, i32
  }
  func.func @transform_2(%arg0: i32) -> (i32, i32) {
    %c0_i32 = arith.constant 0 : i32
    %c0_i32_0 = arith.constant 0 : i32
    %c0_i32_1 = arith.constant 0 : i32
    return %c0_i32, %c0_i32_0 : i32, i32
  }
  func.func @transform_3(%arg0: i32) -> (i32, i32, i32) {
    %c0_i32 = arith.constant 0 : i32
    %c0_i32_0 = arith.constant 0 : i32
    %c0_i32_1 = arith.constant 0 : i32
    return %arg0, %c0_i32, %c0_i32_0 : i32, i32, i32
  }
}

</mosaic_0001>

<llo_original>
// kernel: coord_conv.1
$region0: #{coord_conv.1}
  #allocation0 [shape = 'u32[]', space=smem, size = 0x4, offset = 0x4, fixed_abs, tag = 'smem constant byte address 0x4 - core index']
  #allocation1 [shape = 'u32[144,128]{1,0:T(1,128)}', space=vmem, size = 0x12000, scoped, tag = 'internal scratch']
  #allocation2 [shape = 'f32[8,384]{1,0:T(8,128)}', space=vmem, size = 0x3000, scoped, tag = 'scratch operand']
  %s0 = inlined_call_operand.vmem [shape: f32[2,8,384], index: 0, kind: input, shape index: {}]
  %s1 = inlined_call_operand.vmem [shape: f32[9,8,8], index: 1, kind: input, shape index: {}]
  %s2 = inlined_call_operand.vmem [shape: f32[8,1], index: 2, kind: input, shape index: {}]
  %s3 = inlined_call_operand.vmem [shape: f32[2,8,288], index: 3, kind: output, shape index: {}]
  %s4 = sld [smem:[#allocation0]]
  $region45: #{coord_conv.1} parent=0
    _
  %s6 = ssub.s32 1, %s4
  %s7 = scalar_select 0, %s6, %s4
  loop: start=0, step=1, limit=4
  $region2: #{coord_conv.1} parent=0 // loop_pre_header
    _
  $region3: #{coord_conv.1} parent=0 // loop_header
    %s9 = sphi 0, %s13
    %p10 = scmp.ge.s32.totalorder %s9, 4
    %s19 = sphi 0, %s21
    %s22 = sphi 0, %s19
    %s23 = sphi 0, %s22
    %s39 = sphi 0, %s23
    %s43 = sphi 0, %s43
    %s45 = sphi 0, %s43
    %s46 = sphi 0, %s45
    %s60 = sphi 0, %s46
    %s64 = sphi 0, %s64
    %s66 = sphi 0, %s64
    %s67 = sphi 0, %s66
    %s81 = sphi 0, %s67
    %s87 = sphi 0, %s89
    %s90 = sphi 0, %s87
    %s91 = sphi 0, %s90
    %s107 = sphi 0, %s91
  $region4: #{coord_conv.1} parent=0 // loop_header_branch
    %12 = sbr.rel (%p10) target = $region8
  $region5: #{coord_conv.1} parent=0 // loop_body
    %s14 = ssub.s32 %s9, 1
    %s15 = ssub.s32 %s9, 2
    %s16 = sadd.s32 %s9, 1
    %s17 = ssub.s32 %s9, %s16
    %p18 = scmp.eq.s32.totalorder %s17, 0
    %s20 = sadd.s32 %s19, 1
    %s21 = scalar_select %p18, %s19, %s20
    %p24 = pneg %p18
    %p25 = scmp.eq.s32.totalorder %s9, 1
    %p26 = por %p24, %p25
    %p27 = scmp.ne.s32.totalorder %s19, %s22
    %p28 = scmp.eq.s32.totalorder %s9, 0
    %p29 = por %p27, %p28
    %p30 = scmp.ne.s32.totalorder %s19, %s22
    %p31 = scmp.eq.s32.totalorder %s14, 1
    %p32 = por %p30, %p31
    %p33 = scmp.ne.s32.totalorder %s22, %s23
    %p34 = scmp.eq.s32.totalorder %s14, 0
    %p35 = por %p33, %p34
    %p36 = scmp.ne.s32.totalorder %s22, %s23
    %p37 = scmp.eq.s32.totalorder %s15, 1
    %p38 = por %p36, %p37
    %p40 = scmp.ne.s32.totalorder %s23, %s39
    %p41 = scmp.eq.s32.totalorder %s15, 0
    %p42 = por %p40, %p41
    %s44 = sadd.s32 %s43, 1
    %p47 = scmp.eq.s32.totalorder %s9, 1
    %p48 = scmp.ne.s32.totalorder %s43, %s45
    %p49 = scmp.eq.s32.totalorder %s9, 0
    %p50 = por %p48, %p49
    %p51 = scmp.ne.s32.totalorder %s43, %s45
    %p52 = scmp.eq.s32.totalorder %s14, 1
    %p53 = por %p51, %p52
    %p54 = scmp.ne.s32.totalorder %s45, %s46
    %p55 = scmp.eq.s32.totalorder %s14, 0
    %p56 = por %p54, %p55
    %p57 = scmp.ne.s32.totalorder %s45, %s46
    %p58 = scmp.eq.s32.totalorder %s15, 1
    %p59 = por %p57, %p58
    %p61 = scmp.ne.s32.totalorder %s46, %s60
    %p62 = scmp.eq.s32.totalorder %s15, 0
    %p63 = por %p61, %p62
    %s65 = sadd.s32 %s64, 1
    %p68 = scmp.eq.s32.totalorder %s9, 1
    %p69 = scmp.ne.s32.totalorder %s64, %s66
    %p70 = scmp.eq.s32.totalorder %s9, 0
    %p71 = por %p69, %p70
    %p72 = scmp.ne.s32.totalorder %s64, %s66
    %p73 = scmp.eq.s32.totalorder %s14, 1
    %p74 = por %p72, %p73
    %p75 = scmp.ne.s32.totalorder %s66, %s67
    %p76 = scmp.eq.s32.totalorder %s14, 0
    %p77 = por %p75, %p76
    %p78 = scmp.ne.s32.totalorder %s66, %s67
    %p79 = scmp.eq.s32.totalorder %s15, 1
    %p80 = por %p78, %p79
    %p82 = scmp.ne.s32.totalorder %s67, %s81
    %p83 = scmp.eq.s32.totalorder %s15, 0
    %p84 = por %p82, %p83
    %s85 = ssub.s32 %s9, %s16
    %p86 = scmp.eq.s32.totalorder %s85, 0
    %s88 = sadd.s32 %s87, 1
    %s89 = scalar_select %p86, %s87, %s88
    %p92 = pneg %p86
    %p93 = scmp.eq.s32.totalorder %s9, 1
    %p94 = por %p92, %p93
    %p95 = scmp.ne.s32.totalorder %s87, %s90
    %p96 = scmp.eq.s32.totalorder %s9, 0
    %p97 = por %p95, %p96
    %p98 = scmp.ne.s32.totalorder %s87, %s90
    %p99 = scmp.eq.s32.totalorder %s14, 1
    %p100 = por %p98, %p99
    %p101 = scmp.ne.s32.totalorder %s90, %s91
    %p102 = scmp.eq.s32.totalorder %s14, 0
    %p103 = por %p101, %p102
    %p104 = scmp.ne.s32.totalorder %s90, %s91
    %p105 = scmp.eq.s32.totalorder %s15, 1
    %p106 = por %p104, %p105
    %p108 = scmp.ne.s32.totalorder %s91, %s107
    %p109 = scmp.eq.s32.totalorder %s15, 0
    %p110 = por %p108, %p109
    %p111 = scmp.le.s32.totalorder 1, %s9
    %p112 = scmp.lt.s32.totalorder %s9, 3
    %p113 = pnand %p111, %p112
    %p114 = pneg %p113
    // Predicated region
    $region9: #{coord_conv.1} parent=5 // pred_check
      _
    $region10: #{coord_conv.1} parent=5 // pred_check_branch
      %116 = sbr.rel (%p113) target = $region12
    $region11: #{coord_conv.1} parent=5 // pred_region
      %s117 = ssub.s32 %s9, 1
      // Predicated region
      $region13: #{coord_conv.1} parent=11 // pred_check
        %p118 = pneg %p56
      $region14: #{coord_conv.1} parent=11 // pred_check_branch
        %120 = sbr.rel (%p118) target = $region16
      $region15: #{coord_conv.1} parent=11 // pred_region
        _
      $region16: #{coord_conv.1} parent=11 // pred_fallthru
        _
      // Predicated region
      $region17: #{coord_conv.1} parent=11 // pred_check
        %p121 = pneg %p77
      $region18: #{coord_conv.1} parent=11 // pred_check_branch
        %123 = sbr.rel (%p121) target = $region20
      $region19: #{coord_conv.1} parent=11 // pred_region
        _
      $region20: #{coord_conv.1} parent=11 // pred_fallthru
        _
    $region12: #{coord_conv.1} parent=5 // pred_fallthru
      _
    %p124 = scmp.lt.s32.totalorder %s9, 2
    // Predicated region
    $region21: #{coord_conv.1} parent=5 // pred_check
      %p125 = pneg %p124
    $region22: #{coord_conv.1} parent=5 // pred_check_branch
      %127 = sbr.rel (%p125) target = $region24
    $region23: #{coord_conv.1} parent=5 // pred_region
      // Predicated region
      $region25: #{coord_conv.1} parent=23 // pred_check
        %p128 = pneg %p29
      $region26: #{coord_conv.1} parent=23 // pred_check_branch
        %130 = sbr.rel (%p128) target = $region28
      $region27: #{coord_conv.1} parent=23 // pred_region
        %p131 = scmp.lt.s32.totalorder %s9, 1
        %s132 = scalar_select %p131, %s9, 1
        %s133 = smul.addr %s132, 3
        %s134 = smul.addr %s133, 8
        %s135 = scalar_lea.vmem %s0, %s134
      $region28: #{coord_conv.1} parent=23 // pred_fallthru
        _
    $region24: #{coord_conv.1} parent=5 // pred_fallthru
      _
    %p136 = scmp.le.s32.totalorder 1, %s9
    %p137 = scmp.lt.s32.totalorder %s9, 3
    %p138 = pnand %p136, %p137
    %p139 = pneg %p138
    // Predicated region
    $region29: #{coord_conv.1} parent=5 // pred_check
      _
    $region30: #{coord_conv.1} parent=5 // pred_check_branch
      %141 = sbr.rel (%p138) target = $region32
    $region31: #{coord_conv.1} parent=5 // pred_region
      %s142 = ssub.s32 %s9, 1
      %p143 = scmp.lt.s32.totalorder %s14, 1
      %s144 = scalar_select %p143, %s14, 1
      %s145 = smul.addr %s144, 3
      %s146 = smul.addr %s145, 8
      %s147 = scalar_lea.vmem %s0, %s146
      %p148 = pneg %p35
      %p149 = pneg %p32
      %p150 = pneg %p56
      %p151 = pneg %p53
      %p152 = pneg %p77
      %p153 = pneg %p74
      %p154 = pneg %p103
      %p155 = pneg %p100
      %p156 = scmp.lt.s32.totalorder %s14, 1
      %s157 = scalar_select %p156, %s14, 1
      %s158 = smul.addr %s157, 3
      %s159 = smul.addr %s158, 8
      %s160 = scalar_lea.vmem %s3, %s159
      %p161 = scmp.lt.s32.totalorder %s14, 1
      %s162 = scalar_select %p161, %s14, 1
      %s163 = smul.addr %s162, 3
      %s164 = smul.addr %s163, 8
      %s165 = scalar_lea.vmem %s0, %s164
      %p166 = scmp.lt.s32.totalorder %s14, 1
      %s167 = scalar_select %p166, %s14, 1
      %s168 = smul.addr %s167, 3
      %s169 = smul.addr %s168, 8
      %s170 = scalar_lea.vmem %s3, %s169
      %v171 = vlaneseq
      %v172 = vand.u32 %v171, 127
      %v173 = vadd.s32 %v172, 128
      %v174 = vadd.s32 %v172, 256
      %v175 = vcvt.s32.f32 %v172
      %v176 = vcvt.s32.f32 %v173
      %v177 = vcvt.s32.f32 %v174
      %v178 = vadd.f32 %v175, 0.5
      %v179 = vadd.f32 %v176, 0.5
      %v180 = vadd.f32 %v177, 0.5
      %v181 = vmul.f32 %v178, 0.055555556
      %v182 = vmul.f32 %v179, 0.055555556
      %v183 = vmul.f32 %v180, 0.055555556
      %v184 = vfloor.f32 %v181
      %v185 = vfloor.f32 %v182
      %v186 = vfloor.f32 %v183
      %v187 = vmul.f32 %v184, 18.0
      %v188 = vmul.f32 %v185, 18.0
      %v189 = vmul.f32 %v186, 18.0
      %v190 = vsub.f32 %v175, %v187
      %v191 = vsub.f32 %v176, %v188
      %v192 = vsub.f32 %v177, %v189
      %v193 = vsub.f32 %v184, 1.0
      %v194 = vsub.f32 %v185, 1.0
      %v195 = vsub.f32 %v186, 1.0
      %v196 = vsub.f32 %v190, 1.0
      %v197 = vsub.f32 %v191, 1.0
      %v198 = vsub.f32 %v192, 1.0
      %vm199 = vcmp.ge.f32.partialorder %v193, 0.0
      %vm200 = vcmp.ge.f32.partialorder %v194, 0.0
      %vm201 = vcmp.ge.f32.partialorder %v195, 0.0
      %vm202 = vcmp.le.f32.partialorder %v193, 15.0
      %vm203 = vcmp.le.f32.partialorder %v194, 15.0
      %vm204 = vcmp.le.f32.partialorder %v195, 15.0
      %vm205 = vmand %vm199, %vm202
      %vm206 = vmand %vm200, %vm203
      %vm207 = vmand %vm201, %vm204
      %vm208 = vcmp.ge.f32.partialorder %v196, 0.0
      %vm209 = vcmp.ge.f32.partialorder %v197, 0.0
      %vm210 = vcmp.ge.f32.partialorder %v198, 0.0
      %vm211 = vmand %vm205, %vm208
      %vm212 = vmand %vm206, %vm209
      %vm213 = vmand %vm207, %vm210
      %vm214 = vcmp.le.f32.partialorder %v196, 15.0
      %vm215 = vcmp.le.f32.partialorder %v197, 15.0
      %vm216 = vcmp.le.f32.partialorder %v198, 15.0
      %vm217 = vmand %vm211, %vm214
      %vm218 = vmand %vm212, %vm215
      %vm219 = vmand %vm213, %vm216
      %v220 = vmul.f32 %v193, 2.0
      %v221 = vmul.f32 %v194, 2.0
      %v222 = vmul.f32 %v195, 2.0
      %v223 = vrcp.pop 15.0
      %v224 = vmul.f32 %v220, %v223
      %v225 = vmul.f32 %v221, %v223
      %v226 = vmul.f32 %v222, %v223
      %v227 = vsub.f32 %v224, 1.0
      %v228 = vsub.f32 %v225, 1.0
      %v229 = vsub.f32 %v226, 1.0
      %v230 = vsel %vm217, %v227, 0.0
      %v231 = vsel %vm218, %v228, 0.0
      %v232 = vsel %vm219, %v229, 0.0
      %v233 = vmul.f32 %v196, 2.0
      %v234 = vmul.f32 %v197, 2.0
      %v235 = vmul.f32 %v198, 2.0
      %v236 = vmul.f32 %v233, %v223
      %v237 = vmul.f32 %v234, %v223
      %v238 = vmul.f32 %v235, %v223
      %v239 = vsub.f32 %v236, 1.0
      %v240 = vsub.f32 %v237, 1.0
      %v241 = vsub.f32 %v238, 1.0
      %v242 = vsel %vm217, %v239, 0.0
      %v243 = vsel %vm218, %v240, 0.0
      %v244 = vsel %vm219, %v241, 0.0
      %v245 = vlaneseq
      %v246 = vshrl.u32 %v245, 7
      %v247 = vmul.f32 %v230, %v230
      %v248 = vmul.f32 %v231, %v231
      %v249 = vmul.f32 %v232, %v232
      %v250 = vmul.f32 %v242, %v242
      %v251 = vmul.f32 %v243, %v243
      %v252 = vmul.f32 %v244, %v244
      %v253 = vadd.f32 %v247, %v250
      %v254 = vadd.f32 %v248, %v251
      %v255 = vadd.f32 %v249, %v252
      %v256 = vrsqrt.pop %v253
      %v257 = vmul.f32 %v253, %v256
      %vm258 = vcmp.eq.f32.partialorder %v253, inf
      %v259 = vsel %vm258, %v253, %v257
      %vm260 = vcmp.eq.f32.partialorder %v253, 0.0
      %v261 = vand.u32 %v253, 2147483648
      %v262 = vsel %vm260, %v261, %v259
      %v263 = vrsqrt.pop %v254
      %v264 = vmul.f32 %v254, %v263
      %vm265 = vcmp.eq.f32.partialorder %v254, inf
      %v266 = vsel %vm265, %v254, %v264
      %vm267 = vcmp.eq.f32.partialorder %v254, 0.0
      %v268 = vand.u32 %v254, 2147483648
      %v269 = vsel %vm267, %v268, %v266
      %v270 = vrsqrt.pop %v255
      %v271 = vmul.f32 %v255, %v270
      %vm272 = vcmp.eq.f32.partialorder %v255, inf
      %v273 = vsel %vm272, %v255, %v271
      %vm274 = vcmp.eq.f32.partialorder %v255, 0.0
      %v275 = vand.u32 %v255, 2147483648
      %v276 = vsel %vm274, %v275, %v273
      %v277 = vsel %vm217, %v262, 0.0
      %v278 = vsel %vm218, %v269, 0.0
      %v279 = vsel %vm219, %v276, 0.0
      %v280 = vmax.f32 %v277, %v278
      %v281 = vmax.f32 %v280, %v279
      %282 = vmax.xlane.f32.xlu0 %v281
      %v283 = vpop.xlane.xlu0 %282
      %s284 = vtos %v283
      %v285 = vstv %s284
      %v286 = vrcp.pop %v285
      %v287 = vmul.f32 %v277, %v286
      %v288 = vmul.f32 %v278, %v286
      %v289 = vmul.f32 %v279, %v286
      %vm290 = vcmp.eq.s32.totalorder %v246, 0
      %vm291 = vcmp.eq.s32.totalorder %v246, 1
      %vm292 = vcmp.eq.s32.totalorder %v246, 2
      %v293 = vsel %vm292, %v287, 0.0
      %v294 = vsel %vm292, %v288, 0.0
      %v295 = vsel %vm292, %v289, 0.0
      %v296 = vsel %vm291, %v242, %v293
      %v297 = vsel %vm291, %v243, %v294
      %v298 = vsel %vm291, %v244, %v295
      %v299 = vsel %vm290, %v230, %v296
      %v300 = vsel %vm290, %v231, %v297
      %v301 = vsel %vm290, %v232, %v298
      %v302 = vld [vmem:[%s165] sm:$0xff]
      %v303 = vld [vmem:[%s165 + $0x8] sm:$0xff]
      %v304 = vld [vmem:[%s165 + $0x10] sm:$0xff]
      %v305 = vadd.f32 %v302, %v299
      %v306 = vadd.f32 %v303, %v300
      %v307 = vadd.f32 %v304, %v301
      %308 = vst [vmem:[#allocation2] sm:$0xff] %v305
      %309 = vst [vmem:[#allocation2 + $0x8] sm:$0xff] %v306
      %310 = vst [vmem:[#allocation2 + $0x10] sm:$0xff] %v307
      %v311 = vld [vmem:[#allocation2] sm:$0xff]
      %v312 = vld [vmem:[#allocation2 + $0x8] sm:$0xff]
      %v313 = vld [vmem:[#allocation2 + $0x10] sm:$0xff]
      %v314 = vld [vmem:[%s1] sm:$0xff]
      %s315 = scalar_lea.vmem %s1, 8
      %v316 = vld [vmem:[%s315] sm:$0xff]
      %320 = vrot.lane.b32.xlu0 %v311, 127
      %v321 = vpop.permute.xlu0 %320
      %322 = vrot.lane.b32.xlu0 %v312, 127
      %v323 = vpop.permute.xlu0 %322
      %324 = vrot.lane.b32.xlu0 %v313, 127
      %v325 = vpop.permute.xlu0 %324
      %vm326 = vcmask 1039360
      %v327 = vsel %vm326, %v321, %v323
      %v328 = vsel %vm326, %v323, %v325
      %vm332 = vcmask 64512
      %v334 = vsel %vm332, %v316, 0
      %336 = vmatprep.subr.mxu0 %v328
      %337 = vmatpush1.msra.mxu0 %v327
      %338 = vmatprep.subr.mxu0 0.0
      %339 = vmatpush1.msra.mxu0 0.0
      %340 = vmatprep.subr.mxu0 0.0
      %341 = vmatpush1.msra.mxu0 0.0
      %342 = vmatprep.subr.mxu0 0.0
      %343 = vmatpush1.msra.mxu0 0.0
      %344 = vmatprep.subr.mxu0 0.0
      %345 = vmatpush1.msra.mxu0 0.0
      %346 = vmatprep.subr.mxu0 0.0
      %347 = vmatpush1.msra.mxu0 0.0
      %348 = vmatprep.subr.mxu0 0.0
      %349 = vmatpush1.msra.mxu0 0.0
      %350 = vmatprep.subr.mxu0 0.0
      %351 = vmatpush1.msra.mxu0 0.0
      %352 = vmatprep.subr.mxu0 0.0
      %353 = vmatpush1.msra.mxu0 0.0
      %354 = vmatprep.subr.mxu0 0.0
      %355 = vmatpush1.msra.mxu0 0.0
      %356 = vmatprep.subr.mxu0 0.0
      %357 = vmatpush1.msra.mxu0 0.0
      %358 = vmatprep.subr.mxu0 0.0
      %359 = vmatpush1.msra.mxu0 0.0
      %360 = vmatprep.subr.mxu0 0.0
      %361 = vmatpush1.msra.mxu0 0.0
      %362 = vmatprep.subr.mxu0 0.0
      %363 = vmatpush1.msra.mxu0 0.0
      %364 = vmatprep.subr.mxu0 0.0
      %365 = vmatpush1.msra.mxu0 0.0
      %366 = vmatprep.subr.mxu0 0.0
      %367 = vmatpush1.msra.mxu0 0.0
      %368 = vmatprep.subr.mxu0 0.0
      %369 = vmatpush1.msra.mxu0 0.0
      %370 = vmatprep.subr.mxu0 0.0
      %371 = vmatpush1.msra.mxu0 0.0
      %372 = vmatprep.subr.mxu0 0.0
      %373 = vmatpush1.msra.mxu0 0.0
      %374 = vmatprep.subr.mxu0 0.0
      %375 = vmatpush1.msra.mxu0 0.0
      %376 = vmatprep.subr.mxu0 0.0
      %377 = vmatpush1.msra.mxu0 0.0
      %378 = vmatprep.subr.mxu0 0.0
      %379 = vmatpush1.msra.mxu0 0.0
      %380 = vmatprep.subr.mxu0 0.0
      %381 = vmatpush1.msra.mxu0 0.0
      %382 = vmatprep.subr.mxu0 0.0
      %383 = vmatpush1.msra.mxu0 0.0
      %384 = vmatprep.subr.mxu0 0.0
      %385 = vmatpush1.msra.mxu0 0.0
      %386 = vmatprep.subr.mxu0 0.0
      %387 = vmatpush1.msra.mxu0 0.0
      %388 = vmatprep.subr.mxu0 0.0
      %389 = vmatpush1.msra.mxu0 0.0
      %390 = vmatprep.subr.mxu0 0.0
      %391 = vmatpush1.msra.mxu0 0.0
      %392 = vmatprep.subr.mxu0 0.0
      %393 = vmatpush1.msra.mxu0 0.0
      %394 = vmatprep.subr.mxu0 0.0
      %395 = vmatpush1.msra.mxu0 0.0
      %396 = vmatprep.subr.mxu0 0.0
      %397 = vmatpush1.msra.mxu0 0.0
      %398 = vmatprep.subr.mxu0 0.0
      %399 = vmatpush1.msra.mxu0 0.0
      %400 = vmatprep.mubr.f32.mxu0 0.0
      %401 = vmatmul.mubr.f32.gmra.mrb[0].mxu0 %v334
      %v402 = vpop.f32.mrb[0].mxu0
      %v403 = vadd.f32 0.0, %v402
      %v404 = vpop.f32.mrb[0].mxu0
      %v405 = vadd.f32 0.0, %v404
      %406 = vdwg.mxu0
      %407 = vmatprep.subr.mxu0 0.0
      %408 = vmatpush1.msra.mxu0 %v325
      %409 = vmatprep.subr.mxu0 0.0
      %410 = vmatpush1.msra.mxu0 0.0
      %411 = vmatprep.subr.mxu0 0.0
      %412 = vmatpush1.msra.mxu0 0.0
      %413 = vmatprep.subr.mxu0 0.0
      %414 = vmatpush1.msra.mxu0 0.0
      %415 = vmatprep.subr.mxu0 0.0
      %416 = vmatpush1.msra.mxu0 0.0
      %417 = vmatprep.subr.mxu0 0.0
      %418 = vmatpush1.msra.mxu0 0.0
      %419 = vmatprep.subr.mxu0 0.0
      %420 = vmatpush1.msra.mxu0 0.0
      %421 = vmatprep.subr.mxu0 0.0
      %422 = vmatpush1.msra.mxu0 0.0
      %423 = vmatprep.subr.mxu0 0.0
      %424 = vmatpush1.msra.mxu0 0.0
      %425 = vmatprep.subr.mxu0 0.0
      %426 = vmatpush1.msra.mxu0 0.0
      %427 = vmatprep.subr.mxu0 0.0
      %428 = vmatpush1.msra.mxu0 0.0
      %429 = vmatprep.subr.mxu0 0.0
      %430 = vmatpush1.msra.mxu0 0.0
      %431 = vmatprep.subr.mxu0 0.0
      %432 = vmatpush1.msra.mxu0 0.0
      %433 = vmatprep.subr.mxu0 0.0
      %434 = vmatpush1.msra.mxu0 0.0
      %435 = vmatprep.subr.mxu0 0.0
      %436 = vmatpush1.msra.mxu0 0.0
      %437 = vmatprep.subr.mxu0 0.0
      %438 = vmatpush1.msra.mxu0 0.0
      %439 = vmatprep.subr.mxu0 0.0
      %440 = vmatpush1.msra.mxu0 0.0
      %441 = vmatprep.subr.mxu0 0.0
      %442 = vmatpush1.msra.mxu0 0.0
      %443 = vmatprep.subr.mxu0 0.0
      %444 = vmatpush1.msra.mxu0 0.0
      %445 = vmatprep.subr.mxu0 0.0
      %446 = vmatpush1.msra.mxu0 0.0
      %447 = vmatprep.subr.mxu0 0.0
      %448 = vmatpush1.msra.mxu0 0.0
      %449 = vmatprep.subr.mxu0 0.0
      %450 = vmatpush1.msra.mxu0 0.0
      %451 = vmatprep.subr.mxu0 0.0
      %452 = vmatpush1.msra.mxu0 0.0
      %453 = vmatprep.subr.mxu0 0.0
      %454 = vmatpush1.msra.mxu0 0.0
      %455 = vmatprep.subr.mxu0 0.0
      %456 = vmatpush1.msra.mxu0 0.0
      %457 = vmatprep.subr.mxu0 0.0
      %458 = vmatpush1.msra.mxu0 0.0
      %459 = vmatprep.subr.mxu0 0.0
      %460 = vmatpush1.msra.mxu0 0.0
      %461 = vmatprep.subr.mxu0 0.0
      %462 = vmatpush1.msra.mxu0 0.0
      %463 = vmatprep.subr.mxu0 0.0
      %464 = vmatpush1.msra.mxu0 0.0
      %465 = vmatprep.subr.mxu0 0.0
      %466 = vmatpush1.msra.mxu0 0.0
      %467 = vmatprep.subr.mxu0 0.0
      %468 = vmatpush1.msra.mxu0 0.0
      %469 = vmatprep.subr.mxu0 0.0
      %470 = vmatpush1.msra.mxu0 0.0
      %471 = vmatprep.mubr.f32.mxu0 0.0
      %472 = vmatmul.mubr.f32.gmra.mrb[0].mxu0 %v334
      %v473 = vpop.f32.mrb[0].mxu0
      %v474 = vadd.f32 0.0, %v473
      %v475 = vpop.f32.mrb[0].mxu0
      %476 = vdwg.mxu0
      %v478 = vsel %vm332, %v314, 0
      %480 = vmatprep.subr.mxu0 %v312
      %481 = vmatpush1.msra.mxu0 %v311
      %482 = vmatprep.subr.mxu0 0.0
      %483 = vmatpush1.msra.mxu0 0.0
      %484 = vmatprep.subr.mxu0 0.0
      %485 = vmatpush1.msra.mxu0 0.0
      %486 = vmatprep.subr.mxu0 0.0
      %487 = vmatpush1.msra.mxu0 0.0
      %488 = vmatprep.subr.mxu0 0.0
      %489 = vmatpush1.msra.mxu0 0.0
      %490 = vmatprep.subr.mxu0 0.0
      %491 = vmatpush1.msra.mxu0 0.0
      %492 = vmatprep.subr.mxu0 0.0
      %493 = vmatpush1.msra.mxu0 0.0
      %494 = vmatprep.subr.mxu0 0.0
      %495 = vmatpush1.msra.mxu0 0.0
      %496 = vmatprep.subr.mxu0 0.0
      %497 = vmatpush1.msra.mxu0 0.0
      %498 = vmatprep.subr.mxu0 0.0
      %499 = vmatpush1.msra.mxu0 0.0
      %500 = vmatprep.subr.mxu0 0.0
      %501 = vmatpush1.msra.mxu0 0.0
      %502 = vmatprep.subr.mxu0 0.0
      %503 = vmatpush1.msra.mxu0 0.0
      %504 = vmatprep.subr.mxu0 0.0
      %505 = vmatpush1.msra.mxu0 0.0
      %506 = vmatprep.subr.mxu0 0.0
      %507 = vmatpush1.msra.mxu0 0.0
      %508 = vmatprep.subr.mxu0 0.0
      %509 = vmatpush1.msra.mxu0 0.0
      %510 = vmatprep.subr.mxu0 0.0
      %511 = vmatpush1.msra.mxu0 0.0
      %512 = vmatprep.subr.mxu0 0.0
      %513 = vmatpush1.msra.mxu0 0.0
      %514 = vmatprep.subr.mxu0 0.0
      %515 = vmatpush1.msra.mxu0 0.0
      %516 = vmatprep.subr.mxu0 0.0
      %517 = vmatpush1.msra.mxu0 0.0
      %518 = vmatprep.subr.mxu0 0.0
      %519 = vmatpush1.msra.mxu0 0.0
      %520 = vmatprep.subr.mxu0 0.0
      %521 = vmatpush1.msra.mxu0 0.0
      %522 = vmatprep.subr.mxu0 0.0
      %523 = vmatpush1.msra.mxu0 0.0
      %524 = vmatprep.subr.mxu0 0.0
      %525 = vmatpush1.msra.mxu0 0.0
      %526 = vmatprep.subr.mxu0 0.0
      %527 = vmatpush1.msra.mxu0 0.0
      %528 = vmatprep.subr.mxu0 0.0
      %529 = vmatpush1.msra.mxu0 0.0
      %530 = vmatprep.subr.mxu0 0.0
      %531 = vmatpush1.msra.mxu0 0.0
      %532 = vmatprep.subr.mxu0 0.0
      %533 = vmatpush1.msra.mxu0 0.0
      %534 = vmatprep.subr.mxu0 0.0
      %535 = vmatpush1.msra.mxu0 0.0
      %536 = vmatprep.subr.mxu0 0.0
      %537 = vmatpush1.msra.mxu0 0.0
      %538 = vmatprep.subr.mxu0 0.0
      %539 = vmatpush1.msra.mxu0 0.0
      %540 = vmatprep.subr.mxu0 0.0
      %541 = vmatpush1.msra.mxu0 0.0
      %542 = vmatprep.subr.mxu0 0.0
      %543 = vmatpush1.msra.mxu0 0.0
      %544 = vmatprep.mubr.f32.mxu0 0.0
      %545 = vmatmul.mubr.f32.gmra.mrb[0].mxu0 %v478
      %v546 = vpop.f32.mrb[0].mxu0
      %v547 = vadd.f32 %v403, %v546
      %v548 = vpop.f32.mrb[0].mxu0
      %v549 = vadd.f32 %v405, %v548
      %550 = vdwg.mxu0
      %551 = vmatprep.subr.mxu0 0.0
      %552 = vmatpush1.msra.mxu0 %v313
      %553 = vmatprep.subr.mxu0 0.0
      %554 = vmatpush1.msra.mxu0 0.0
      %555 = vmatprep.subr.mxu0 0.0
      %556 = vmatpush1.msra.mxu0 0.0
      %557 = vmatprep.subr.mxu0 0.0
      %558 = vmatpush1.msra.mxu0 0.0
      %559 = vmatprep.subr.mxu0 0.0
      %560 = vmatpush1.msra.mxu0 0.0
      %561 = vmatprep.subr.mxu0 0.0
      %562 = vmatpush1.msra.mxu0 0.0
      %563 = vmatprep.subr.mxu0 0.0
      %564 = vmatpush1.msra.mxu0 0.0
      %565 = vmatprep.subr.mxu0 0.0
      %566 = vmatpush1.msra.mxu0 0.0
      %567 = vmatprep.subr.mxu0 0.0
      %568 = vmatpush1.msra.mxu0 0.0
      %569 = vmatprep.subr.mxu0 0.0
      %570 = vmatpush1.msra.mxu0 0.0
      %571 = vmatprep.subr.mxu0 0.0
      %572 = vmatpush1.msra.mxu0 0.0
      %573 = vmatprep.subr.mxu0 0.0
      %574 = vmatpush1.msra.mxu0 0.0
      %575 = vmatprep.subr.mxu0 0.0
      %576 = vmatpush1.msra.mxu0 0.0
      %577 = vmatprep.subr.mxu0 0.0
      %578 = vmatpush1.msra.mxu0 0.0
      %579 = vmatprep.subr.mxu0 0.0
      %580 = vmatpush1.msra.mxu0 0.0
      %581 = vmatprep.subr.mxu0 0.0
      %582 = vmatpush1.msra.mxu0 0.0
      %583 = vmatprep.subr.mxu0 0.0
      %584 = vmatpush1.msra.mxu0 0.0
      %585 = vmatprep.subr.mxu0 0.0
      %586 = vmatpush1.msra.mxu0 0.0
      %587 = vmatprep.subr.mxu0 0.0
      %588 = vmatpush1.msra.mxu0 0.0
      %589 = vmatprep.subr.mxu0 0.0
      %590 = vmatpush1.msra.mxu0 0.0
      %591 = vmatprep.subr.mxu0 0.0
      %592 = vmatpush1.msra.mxu0 0.0
      %593 = vmatprep.subr.mxu0 0.0
      %594 = vmatpush1.msra.mxu0 0.0
      %595 = vmatprep.subr.mxu0 0.0
      %596 = vmatpush1.msra.mxu0 0.0
      %597 = vmatprep.subr.mxu0 0.0
      %598 = vmatpush1.msra.mxu0 0.0
      %599 = vmatprep.subr.mxu0 0.0
      %600 = vmatpush1.msra.mxu0 0.0
      %601 = vmatprep.subr.mxu0 0.0
      %602 = vmatpush1.msra.mxu0 0.0
      %603 = vmatprep.subr.mxu0 0.0
      %604 = vmatpush1.msra.mxu0 0.0
      %605 = vmatprep.subr.mxu0 0.0
      %606 = vmatpush1.msra.mxu0 0.0
      %607 = vmatprep.subr.mxu0 0.0
      %608 = vmatpush1.msra.mxu0 0.0
      %609 = vmatprep.subr.mxu0 0.0
      %610 = vmatpush1.msra.mxu0 0.0
      %611 = vmatprep.subr.mxu0 0.0
      %612 = vmatpush1.msra.mxu0 0.0
      %613 = vmatprep.subr.mxu0 0.0
      %614 = vmatpush1.msra.mxu0 0.0
      %615 = vmatprep.mubr.f32.mxu0 0.0
      %616 = vmatmul.mubr.f32.gmra.mrb[0].mxu0 %v478
      %v617 = vpop.f32.mrb[0].mxu0
      %v618 = vadd.f32 %v474, %v617
      %v619 = vpop.f32.mrb[0].mxu0
      %620 = vdwg.mxu0
      %s621 = scalar_lea.vmem %s1, 16
      %v622 = vld [vmem:[%s621] sm:$0xff]
      %623 = vrot.lane.b32.xlu0 %v311, 126
      %v624 = vpop.permute.xlu0 %623
      %625 = vrot.lane.b32.xlu0 %v312, 126
      %v626 = vpop.permute.xlu0 %625
      %627 = vrot.lane.b32.xlu0 %v313, 126
      %v628 = vpop.permute.xlu0 %627
      %vm629 = vcmask 1031168
      %v630 = vsel %vm629, %v624, %v626
      %v631 = vsel %vm629, %v626, %v628
      %v636 = vsel %vm332, %v622, 0
      %638 = vmatprep.subr.mxu0 %v631
      %639 = vmatpush1.msra.mxu0 %v630
      %640 = vmatprep.subr.mxu0 0.0
      %641 = vmatpush1.msra.mxu0 0.0
      %642 = vmatprep.subr.mxu0 0.0
      %643 = vmatpush1.msra.mxu0 0.0
      %644 = vmatprep.subr.mxu0 0.0
      %645 = vmatpush1.msra.mxu0 0.0
      %646 = vmatprep.subr.mxu0 0.0
      %647 = vmatpush1.msra.mxu0 0.0
      %648 = vmatprep.subr.mxu0 0.0
      %649 = vmatpush1.msra.mxu0 0.0
      %650 = vmatprep.subr.mxu0 0.0
      %651 = vmatpush1.msra.mxu0 0.0
      %652 = vmatprep.subr.mxu0 0.0
      %653 = vmatpush1.msra.mxu0 0.0
      %654 = vmatprep.subr.mxu0 0.0
      %655 = vmatpush1.msra.mxu0 0.0
      %656 = vmatprep.subr.mxu0 0.0
      %657 = vmatpush1.msra.mxu0 0.0
      %658 = vmatprep.subr.mxu0 0.0
      %659 = vmatpush1.msra.mxu0 0.0
      %660 = vmatprep.subr.mxu0 0.0
      %661 = vmatpush1.msra.mxu0 0.0
      %662 = vmatprep.subr.mxu0 0.0
      %663 = vmatpush1.msra.mxu0 0.0
      %664 = vmatprep.subr.mxu0 0.0
      %665 = vmatpush1.msra.mxu0 0.0
      %666 = vmatprep.subr.mxu0 0.0
      %667 = vmatpush1.msra.mxu0 0.0
      %668 = vmatprep.subr.mxu0 0.0
      %669 = vmatpush1.msra.mxu0 0.0
      %670 = vmatprep.subr.mxu0 0.0
      %671 = vmatpush1.msra.mxu0 0.0
      %672 = vmatprep.subr.mxu0 0.0
      %673 = vmatpush1.msra.mxu0 0.0
      %674 = vmatprep.subr.mxu0 0.0
      %675 = vmatpush1.msra.mxu0 0.0
      %676 = vmatprep.subr.mxu0 0.0
      %677 = vmatpush1.msra.mxu0 0.0
      %678 = vmatprep.subr.mxu0 0.0
      %679 = vmatpush1.msra.mxu0 0.0
      %680 = vmatprep.subr.mxu0 0.0
      %681 = vmatpush1.msra.mxu0 0.0
      %682 = vmatprep.subr.mxu0 0.0
      %683 = vmatpush1.msra.mxu0 0.0
      %684 = vmatprep.subr.mxu0 0.0
      %685 = vmatpush1.msra.mxu0 0.0
      %686 = vmatprep.subr.mxu0 0.0
      %687 = vmatpush1.msra.mxu0 0.0
      %688 = vmatprep.subr.mxu0 0.0
      %689 = vmatpush1.msra.mxu0 0.0
      %690 = vmatprep.subr.mxu0 0.0
      %691 = vmatpush1.msra.mxu0 0.0
      %692 = vmatprep.subr.mxu0 0.0
      %693 = vmatpush1.msra.mxu0 0.0
      %694 = vmatprep.subr.mxu0 0.0
      %695 = vmatpush1.msra.mxu0 0.0
      %696 = vmatprep.subr.mxu0 0.0
      %697 = vmatpush1.msra.mxu0 0.0
      %698 = vmatprep.subr.mxu0 0.0
      %699 = vmatpush1.msra.mxu0 0.0
      %700 = vmatprep.subr.mxu0 0.0
      %701 = vmatpush1.msra.mxu0 0.0
      %702 = vmatprep.mubr.f32.mxu0 0.0
      %703 = vmatmul.mubr.f32.gmra.mrb[0].mxu0 %v636
      %v704 = vpop.f32.mrb[0].mxu0
      %v705 = vadd.f32 0.0, %v704
      %v706 = vpop.f32.mrb[0].mxu0
      %v707 = vadd.f32 0.0, %v706
      %708 = vdwg.mxu0
      %709 = vmatprep.subr.mxu0 0.0
      %710 = vmatpush1.msra.mxu0 %v628
      %711 = vmatprep.subr.mxu0 0.0
      %712 = vmatpush1.msra.mxu0 0.0
      %713 = vmatprep.subr.mxu0 0.0
      %714 = vmatpush1.msra.mxu0 0.0
      %715 = vmatprep.subr.mxu0 0.0
      %716 = vmatpush1.msra.mxu0 0.0
      %717 = vmatprep.subr.mxu0 0.0
      %718 = vmatpush1.msra.mxu0 0.0
      %719 = vmatprep.subr.mxu0 0.0
      %720 = vmatpush1.msra.mxu0 0.0
      %721 = vmatprep.subr.mxu0 0.0
      %722 = vmatpush1.msra.mxu0 0.0
      %723 = vmatprep.subr.mxu0 0.0
      %724 = vmatpush1.msra.mxu0 0.0
      %725 = vmatprep.subr.mxu0 0.0
      %726 = vmatpush1.msra.mxu0 0.0
      %727 = vmatprep.subr.mxu0 0.0
      %728 = vmatpush1.msra.mxu0 0.0
      %729 = vmatprep.subr.mxu0 0.0
      %730 = vmatpush1.msra.mxu0 0.0
      %731 = vmatprep.subr.mxu0 0.0
      %732 = vmatpush1.msra.mxu0 0.0
      %733 = vmatprep.subr.mxu0 0.0
      %734 = vmatpush1.msra.mxu0 0.0
      %735 = vmatprep.subr.mxu0 0.0
      %736 = vmatpush1.msra.mxu0 0.0
      %737 = vmatprep.subr.mxu0 0.0
      %738 = vmatpush1.msra.mxu0 0.0
      %739 = vmatprep.subr.mxu0 0.0
      %740 = vmatpush1.msra.mxu0 0.0
      %741 = vmatprep.subr.mxu0 0.0
      %742 = vmatpush1.msra.mxu0 0.0
      %743 = vmatprep.subr.mxu0 0.0
      %744 = vmatpush1.msra.mxu0 0.0
      %745 = vmatprep.subr.mxu0 0.0
      %746 = vmatpush1.msra.mxu0 0.0
      %747 = vmatprep.subr.mxu0 0.0
      %748 = vmatpush1.msra.mxu0 0.0
      %749 = vmatprep.subr.mxu0 0.0
      %750 = vmatpush1.msra.mxu0 0.0
      %751 = vmatprep.subr.mxu0 0.0
      %752 = vmatpush1.msra.mxu0 0.0
      %753 = vmatprep.subr.mxu0 0.0
      %754 = vmatpush1.msra.mxu0 0.0
      %755 = vmatprep.subr.mxu0 0.0
      %756 = vmatpush1.msra.mxu0 0.0
      %757 = vmatprep.subr.mxu0 0.0
      %758 = vmatpush1.msra.mxu0 0.0
      %759 = vmatprep.subr.mxu0 0.0
      %760 = vmatpush1.msra.mxu0 0.0
      %761 = vmatprep.subr.mxu0 0.0
      %762 = vmatpush1.msra.mxu0 0.0
      %763 = vmatprep.subr.mxu0 0.0
      %764 = vmatpush1.msra.mxu0 0.0
      %765 = vmatprep.subr.mxu0 0.0
      %766 = vmatpush1.msra.mxu0 0.0
      %767 = vmatprep.subr.mxu0 0.0
      %768 = vmatpush1.msra.mxu0 0.0
      %769 = vmatprep.subr.mxu0 0.0
      %770 = vmatpush1.msra.mxu0 0.0
      %771 = vmatprep.subr.mxu0 0.0
      %772 = vmatpush1.msra.mxu0 0.0
      %773 = vmatprep.mubr.f32.mxu0 0.0
      %774 = vmatmul.mubr.f32.gmra.mrb[0].mxu0 %v636
      %v775 = vpop.f32.mrb[0].mxu0
      %v776 = vadd.f32 0.0, %v775
      %v777 = vpop.f32.mrb[0].mxu0
      %778 = vdwg.mxu0
      %v779 = vadd.f32 %v547, %v705
      %v780 = vadd.f32 %v549, %v707
      %v781 = vadd.f32 %v618, %v776
      %s782 = scalar_lea.vmem %s1, 24
      %v783 = vld [vmem:[%s782] sm:$0xff]
      %784 = vrot.lane.b32.xlu0 %v311, 110
      %v785 = vpop.permute.xlu0 %784
      %786 = vrot.lane.b32.xlu0 %v312, 110
      %v787 = vpop.permute.xlu0 %786
      %788 = vrot.lane.b32.xlu0 %v313, 110
      %v789 = vpop.permute.xlu0 %788
      %vm790 = vcmask 900096
      %v791 = vsel %vm790, %v785, %v787
      %v792 = vsel %vm790, %v787, %v789
      %v797 = vsel %vm332, %v783, 0
      %799 = vmatprep.subr.mxu0 %v792
      %800 = vmatpush1.msra.mxu0 %v791
      %801 = vmatprep.subr.mxu0 0.0
      %802 = vmatpush1.msra.mxu0 0.0
      %803 = vmatprep.subr.mxu0 0.0
      %804 = vmatpush1.msra.mxu0 0.0
      %805 = vmatprep.subr.mxu0 0.0
      %806 = vmatpush1.msra.mxu0 0.0
      %807 = vmatprep.subr.mxu0 0.0
      %808 = vmatpush1.msra.mxu0 0.0
      %809 = vmatprep.subr.mxu0 0.0
      %810 = vmatpush1.msra.mxu0 0.0
      %811 = vmatprep.subr.mxu0 0.0
      %812 = vmatpush1.msra.mxu0 0.0
      %813 = vmatprep.subr.mxu0 0.0
      %814 = vmatpush1.msra.mxu0 0.0
      %815 = vmatprep.subr.mxu0 0.0
      %816 = vmatpush1.msra.mxu0 0.0
      %817 = vmatprep.subr.mxu0 0.0
      %818 = vmatpush1.msra.mxu0 0.0
      %819 = vmatprep.subr.mxu0 0.0
      %820 = vmatpush1.msra.mxu0 0.0
      %821 = vmatprep.subr.mxu0 0.0
      %822 = vmatpush1.msra.mxu0 0.0
      %823 = vmatprep.subr.mxu0 0.0
      %824 = vmatpush1.msra.mxu0 0.0
      %825 = vmatprep.subr.mxu0 0.0
      %826 = vmatpush1.msra.mxu0 0.0
      %827 = vmatprep.subr.mxu0 0.0
      %828 = vmatpush1.msra.mxu0 0.0
      %829 = vmatprep.subr.mxu0 0.0
      %830 = vmatpush1.msra.mxu0 0.0
      %831 = vmatprep.subr.mxu0 0.0
      %832 = vmatpush1.msra.mxu0 0.0
      %833 = vmatprep.subr.mxu0 0.0
      %834 = vmatpush1.msra.mxu0 0.0
      %835 = vmatprep.subr.mxu0 0.0
      %836 = vmatpush1.msra.mxu0 0.0
      %837 = vmatprep.subr.mxu0 0.0
      %838 = vmatpush1.msra.mxu0 0.0
      %839 = vmatprep.subr.mxu0 0.0
      %840 = vmatpush1.msra.mxu0 0.0
      %841 = vmatprep.subr.mxu0 0.0
      %842 = vmatpush1.msra.mxu0 0.0
      %843 = vmatprep.subr.mxu0 0.0
      %844 = vmatpush1.msra.mxu0 0.0
      %845 = vmatprep.subr.mxu0 0.0
      %846 = vmatpush1.msra.mxu0 0.0
      %847 = vmatprep.subr.mxu0 0.0
      %848 = vmatpush1.msra.mxu0 0.0
      %849 = vmatprep.subr.mxu0 0.0
      %850 = vmatpush1.msra.mxu0 0.0
      %851 = vmatprep.subr.mxu0 0.0
      %852 = vmatpush1.msra.mxu0 0.0
      %853 = vmatprep.subr.mxu0 0.0
      %854 = vmatpush1.msra.mxu0 0.0
      %855 = vmatprep.subr.mxu0 0.0
      %856 = vmatpush1.msra.mxu0 0.0
      %857 = vmatprep.subr.mxu0 0.0
      %858 = vmatpush1.msra.mxu0 0.0
      %859 = vmatprep.subr.mxu0 0.0
      %860 = vmatpush1.msra.mxu0 0.0
      %861 = vmatprep.subr.mxu0 0.0
      %862 = vmatpush1.msra.mxu0 0.0
      %863 = vmatprep.mubr.f32.mxu0 0.0
      %864 = vmatmul.mubr.f32.gmra.mrb[0].mxu0 %v797
      %v865 = vpop.f32.mrb[0].mxu0
      %v866 = vadd.f32 0.0, %v865
      %v867 = vpop.f32.mrb[0].mxu0
      %v868 = vadd.f32 0.0, %v867
      %869 = vdwg.mxu0
      %870 = vmatprep.subr.mxu0 0.0
      %871 = vmatpush1.msra.mxu0 %v789
      %872 = vmatprep.subr.mxu0 0.0
      %873 = vmatpush1.msra.mxu0 0.0
      %874 = vmatprep.subr.mxu0 0.0
      %875 = vmatpush1.msra.mxu0 0.0
      %876 = vmatprep.subr.mxu0 0.0
      %877 = vmatpush1.msra.mxu0 0.0
      %878 = vmatprep.subr.mxu0 0.0
      %879 = vmatpush1.msra.mxu0 0.0
      %880 = vmatprep.subr.mxu0 0.0
      %881 = vmatpush1.msra.mxu0 0.0
      %882 = vmatprep.subr.mxu0 0.0
      %883 = vmatpush1.msra.mxu0 0.0
      %884 = vmatprep.subr.mxu0 0.0
      %885 = vmatpush1.msra.mxu0 0.0
      %886 = vmatprep.subr.mxu0 0.0
      %887 = vmatpush1.msra.mxu0 0.0
      %888 = vmatprep.subr.mxu0 0.0
      %889 = vmatpush1.msra.mxu0 0.0
      %890 = vmatprep.subr.mxu0 0.0
      %891 = vmatpush1.msra.mxu0 0.0
      %892 = vmatprep.subr.mxu0 0.0
      %893 = vmatpush1.msra.mxu0 0.0
      %894 = vmatprep.subr.mxu0 0.0
      %895 = vmatpush1.msra.mxu0 0.0
      %896 = vmatprep.subr.mxu0 0.0
      %897 = vmatpush1.msra.mxu0 0.0
      %898 = vmatprep.subr.mxu0 0.0
      %899 = vmatpush1.msra.mxu0 0.0
      %900 = vmatprep.subr.mxu0 0.0
      %901 = vmatpush1.msra.mxu0 0.0
      %902 = vmatprep.subr.mxu0 0.0
      %903 = vmatpush1.msra.mxu0 0.0
      %904 = vmatprep.subr.mxu0 0.0
      %905 = vmatpush1.msra.mxu0 0.0
      %906 = vmatprep.subr.mxu0 0.0
      %907 = vmatpush1.msra.mxu0 0.0
      %908 = vmatprep.subr.mxu0 0.0
      %909 = vmatpush1.msra.mxu0 0.0
      %910 = vmatprep.subr.mxu0 0.0
      %911 = vmatpush1.msra.mxu0 0.0
      %912 = vmatprep.subr.mxu0 0.0
      %913 = vmatpush1.msra.mxu0 0.0
      %914 = vmatprep.subr.mxu0 0.0
      %915 = vmatpush1.msra.mxu0 0.0
      %916 = vmatprep.subr.mxu0 0.0
      %917 = vmatpush1.msra.mxu0 0.0
      %918 = vmatprep.subr.mxu0 0.0
      %919 = vmatpush1.msra.mxu0 0.0
      %920 = vmatprep.subr.mxu0 0.0
      %921 = vmatpush1.msra.mxu0 0.0
      %922 = vmatprep.subr.mxu0 0.0
      %923 = vmatpush1.msra.mxu0 0.0
      %924 = vmatprep.subr.mxu0 0.0
      %925 = vmatpush1.msra.mxu0 0.0
      %926 = vmatprep.subr.mxu0 0.0
      %927 = vmatpush1.msra.mxu0 0.0
      %928 = vmatprep.subr.mxu0 0.0
      %929 = vmatpush1.msra.mxu0 0.0
      %930 = vmatprep.subr.mxu0 0.0
      %931 = vmatpush1.msra.mxu0 0.0
      %932 = vmatprep.subr.mxu0 0.0
      %933 = vmatpush1.msra.mxu0 0.0
      %934 = vmatprep.mubr.f32.mxu0 0.0
      %935 = vmatmul.mubr.f32.gmra.mrb[0].mxu0 %v797
      %v936 = vpop.f32.mrb[0].mxu0
      %v937 = vadd.f32 0.0, %v936
      %v938 = vpop.f32.mrb[0].mxu0
      %939 = vdwg.mxu0
      %v940 = vadd.f32 %v779, %v866
      %v941 = vadd.f32 %v780, %v868
      %v942 = vadd.f32 %v781, %v937
      %s943 = scalar_lea.vmem %s1, 32
      %v944 = vld [vmem:[%s943] sm:$0xff]
      %945 = vrot.lane.b32.xlu0 %v311, 109
      %v946 = vpop.permute.xlu0 %945
      %947 = vrot.lane.b32.xlu0 %v312, 109
      %v948 = vpop.permute.xlu0 %947
      %949 = vrot.lane.b32.xlu0 %v313, 109
      %v950 = vpop.permute.xlu0 %949
      %vm951 = vcmask 891904
      %v952 = vsel %vm951, %v946, %v948
      %v953 = vsel %vm951, %v948, %v950
      %v958 = vsel %vm332, %v944, 0
      %960 = vmatprep.subr.mxu0 %v953
      %961 = vmatpush1.msra.mxu0 %v952
      %962 = vmatprep.subr.mxu0 0.0
      %963 = vmatpush1.msra.mxu0 0.0
      %964 = vmatprep.subr.mxu0 0.0
      %965 = vmatpush1.msra.mxu0 0.0
      %966 = vmatprep.subr.mxu0 0.0
      %967 = vmatpush1.msra.mxu0 0.0
      %968 = vmatprep.subr.mxu0 0.0
      %969 = vmatpush1.msra.mxu0 0.0
      %970 = vmatprep.subr.mxu0 0.0
      %971 = vmatpush1.msra.mxu0 0.0
      %972 = vmatprep.subr.mxu0 0.0
      %973 = vmatpush1.msra.mxu0 0.0
      %974 = vmatprep.subr.mxu0 0.0
      %975 = vmatpush1.msra.mxu0 0.0
      %976 = vmatprep.subr.mxu0 0.0
      %977 = vmatpush1.msra.mxu0 0.0
      %978 = vmatprep.subr.mxu0 0.0
      %979 = vmatpush1.msra.mxu0 0.0
      %980 = vmatprep.subr.mxu0 0.0
      %981 = vmatpush1.msra.mxu0 0.0
      %982 = vmatprep.subr.mxu0 0.0
      %983 = vmatpush1.msra.mxu0 0.0
      %984 = vmatprep.subr.mxu0 0.0
      %985 = vmatpush1.msra.mxu0 0.0
      %986 = vmatprep.subr.mxu0 0.0
      %987 = vmatpush1.msra.mxu0 0.0
      %988 = vmatprep.subr.mxu0 0.0
      %989 = vmatpush1.msra.mxu0 0.0
      %990 = vmatprep.subr.mxu0 0.0
      %991 = vmatpush1.msra.mxu0 0.0
      %992 = vmatprep.subr.mxu0 0.0
      %993 = vmatpush1.msra.mxu0 0.0
      %994 = vmatprep.subr.mxu0 0.0
      %995 = vmatpush1.msra.mxu0 0.0
      %996 = vmatprep.subr.mxu0 0.0
      %997 = vmatpush1.msra.mxu0 0.0
      %998 = vmatprep.subr.mxu0 0.0
      %999 = vmatpush1.msra.mxu0 0.0
      %1000 = vmatprep.subr.mxu0 0.0
      %1001 = vmatpush1.msra.mxu0 0.0
      %1002 = vmatprep.subr.mxu0 0.0
      %1003 = vmatpush1.msra.mxu0 0.0
      %1004 = vmatprep.subr.mxu0 0.0
      %1005 = vmatpush1.msra.mxu0 0.0
      %1006 = vmatprep.subr.mxu0 0.0
      %1007 = vmatpush1.msra.mxu0 0.0
      %1008 = vmatprep.subr.mxu0 0.0
      %1009 = vmatpush1.msra.mxu0 0.0
      %1010 = vmatprep.subr.mxu0 0.0
      %1011 = vmatpush1.msra.mxu0 0.0
      %1012 = vmatprep.subr.mxu0 0.0
      %1013 = vmatpush1.msra.mxu0 0.0
      %1014 = vmatprep.subr.mxu0 0.0
      %1015 = vmatpush1.msra.mxu0 0.0
      %1016 = vmatprep.subr.mxu0 0.0
      %1017 = vmatpush1.msra.mxu0 0.0
      %1018 = vmatprep.subr.mxu0 0.0
      %1019 = vmatpush1.msra.mxu0 0.0
      %1020 = vmatprep.subr.mxu0 0.0
      %1021 = vmatpush1.msra.mxu0 0.0
      %1022 = vmatprep.subr.mxu0 0.0
      %1023 = vmatpush1.msra.mxu0 0.0
      %1024 = vmatprep.mubr.f32.mxu0 0.0
      %1025 = vmatmul.mubr.f32.gmra.mrb[0].mxu0 %v958
      %v1026 = vpop.f32.mrb[0].mxu0
      %v1027 = vadd.f32 0.0, %v1026
      %v1028 = vpop.f32.mrb[0].mxu0
      %v1029 = vadd.f32 0.0, %v1028
      %1030 = vdwg.mxu0
      %1031 = vmatprep.subr.mxu0 0.0
      %1032 = vmatpush1.msra.mxu0 %v950
      %1033 = vmatprep.subr.mxu0 0.0
      %1034 = vmatpush1.msra.mxu0 0.0
      %1035 = vmatprep.subr.mxu0 0.0
      %1036 = vmatpush1.msra.mxu0 0.0
      %1037 = vmatprep.subr.mxu0 0.0
      %1038 = vmatpush1.msra.mxu0 0.0
      %1039 = vmatprep.subr.mxu0 0.0
      %1040 = vmatpush1.msra.mxu0 0.0
      %1041 = vmatprep.subr.mxu0 0.0
      %1042 = vmatpush1.msra.mxu0 0.0
      %1043 = vmatprep.subr.mxu0 0.0
      %1044 = vmatpush1.msra.mxu0 0.0
      %1045 = vmatprep.subr.mxu0 0.0
      %1046 = vmatpush1.msra.mxu0 0.0
      %1047 = vmatprep.subr.mxu0 0.0
      %1048 = vmatpush1.msra.mxu0 0.0
      %1049 = vmatprep.subr.mxu0 0.0
      %1050 = vmatpush1.msra.mxu0 0.0
      %1051 = vmatprep.subr.mxu0 0.0
      %1052 = vmatpush1.msra.mxu0 0.0
      %1053 = vmatprep.subr.mxu0 0.0
      %1054 = vmatpush1.msra.mxu0 0.0
      %1055 = vmatprep.subr.mxu0 0.0
      %1056 = vmatpush1.msra.mxu0 0.0
      %1057 = vmatprep.subr.mxu0 0.0
      %1058 = vmatpush1.msra.mxu0 0.0
      %1059 = vmatprep.subr.mxu0 0.0
      %1060 = vmatpush1.msra.mxu0 0.0
      %1061 = vmatprep.subr.mxu0 0.0
      %1062 = vmatpush1.msra.mxu0 0.0
      %1063 = vmatprep.subr.mxu0 0.0
      %1064 = vmatpush1.msra.mxu0 0.0
      %1065 = vmatprep.subr.mxu0 0.0
      %1066 = vmatpush1.msra.mxu0 0.0
      %1067 = vmatprep.subr.mxu0 0.0
      %1068 = vmatpush1.msra.mxu0 0.0
      %1069 = vmatprep.subr.mxu0 0.0
      %1070 = vmatpush1.msra.mxu0 0.0
      %1071 = vmatprep.subr.mxu0 0.0
      %1072 = vmatpush1.msra.mxu0 0.0
      %1073 = vmatprep.subr.mxu0 0.0
      %1074 = vmatpush1.msra.mxu0 0.0
      %1075 = vmatprep.subr.mxu0 0.0
      %1076 = vmatpush1.msra.mxu0 0.0
      %1077 = vmatprep.subr.mxu0 0.0
      %1078 = vmatpush1.msra.mxu0 0.0
      %1079 = vmatprep.subr.mxu0 0.0
      %1080 = vmatpush1.msra.mxu0 0.0
      %1081 = vmatprep.subr.mxu0 0.0
      %1082 = vmatpush1.msra.mxu0 0.0
      %1083 = vmatprep.subr.mxu0 0.0
      %1084 = vmatpush1.msra.mxu0 0.0
      %1085 = vmatprep.subr.mxu0 0.0
      %1086 = vmatpush1.msra.mxu0 0.0
      %1087 = vmatprep.subr.mxu0 0.0
      %1088 = vmatpush1.msra.mxu0 0.0
      %1089 = vmatprep.subr.mxu0 0.0
      %1090 = vmatpush1.msra.mxu0 0.0
      %1091 = vmatprep.subr.mxu0 0.0
      %1092 = vmatpush1.msra.mxu0 0.0
      %1093 = vmatprep.subr.mxu0 0.0
      %1094 = vmatpush1.msra.mxu0 0.0
      %1095 = vmatprep.mubr.f32.mxu0 0.0
      %1096 = vmatmul.mubr.f32.gmra.mrb[0].mxu0 %v958
      %v1097 = vpop.f32.mrb[0].mxu0
      %v1098 = vadd.f32 0.0, %v1097
      %v1099 = vpop.f32.mrb[0].mxu0
      %1100 = vdwg.mxu0
      %v1101 = vadd.f32 %v940, %v1027
      %v1102 = vadd.f32 %v941, %v1029
      %v1103 = vadd.f32 %v942, %v1098
      %s1104 = scalar_lea.vmem %s1, 40
      %v1105 = vld [vmem:[%s1104] sm:$0xff]
      %1106 = vrot.lane.b32.xlu0 %v311, 108
      %v1107 = vpop.permute.xlu0 %1106
      %1108 = vrot.lane.b32.xlu0 %v312, 108
      %v1109 = vpop.permute.xlu0 %1108
      %1110 = vrot.lane.b32.xlu0 %v313, 108
      %v1111 = vpop.permute.xlu0 %1110
      %vm1112 = vcmask 883712
      %v1113 = vsel %vm1112, %v1107, %v1109
      %v1114 = vsel %vm1112, %v1109, %v1111
      %v1119 = vsel %vm332, %v1105, 0
      %1121 = vmatprep.subr.mxu0 %v1114
      %1122 = vmatpush1.msra.mxu0 %v1113
      %1123 = vmatprep.subr.mxu0 0.0
      %1124 = vmatpush1.msra.mxu0 0.0
      %1125 = vmatprep.subr.mxu0 0.0
      %1126 = vmatpush1.msra.mxu0 0.0
      %1127 = vmatprep.subr.mxu0 0.0
      %1128 = vmatpush1.msra.mxu0 0.0
      %1129 = vmatprep.subr.mxu0 0.0
      %1130 = vmatpush1.msra.mxu0 0.0
      %1131 = vmatprep.subr.mxu0 0.0
      %1132 = vmatpush1.msra.mxu0 0.0
      %1133 = vmatprep.subr.mxu0 0.0
      %1134 = vmatpush1.msra.mxu0 0.0
      %1135 = vmatprep.subr.mxu0 0.0
      %1136 = vmatpush1.msra.mxu0 0.0
      %1137 = vmatprep.subr.mxu0 0.0
      %1138 = vmatpush1.msra.mxu0 0.0
      %1139 = vmatprep.subr.mxu0 0.0
      %1140 = vmatpush1.msra.mxu0 0.0
      %1141 = vmatprep.subr.mxu0 0.0
      %1142 = vmatpush1.msra.mxu0 0.0
      %1143 = vmatprep.subr.mxu0 0.0
      %1144 = vmatpush1.msra.mxu0 0.0
      %1145 = vmatprep.subr.mxu0 0.0
      %1146 = vmatpush1.msra.mxu0 0.0
      %1147 = vmatprep.subr.mxu0 0.0
      %1148 = vmatpush1.msra.mxu0 0.0
      %1149 = vmatprep.subr.mxu0 0.0
      %1150 = vmatpush1.msra.mxu0 0.0
      %1151 = vmatprep.subr.mxu0 0.0
      %1152 = vmatpush1.msra.mxu0 0.0
      %1153 = vmatprep.subr.mxu0 0.0
      %1154 = vmatpush1.msra.mxu0 0.0
      %1155 = vmatprep.subr.mxu0 0.0
      %1156 = vmatpush1.msra.mxu0 0.0
      %1157 = vmatprep.subr.mxu0 0.0
      %1158 = vmatpush1.msra.mxu0 0.0
      %1159 = vmatprep.subr.mxu0 0.0
      %1160 = vmatpush1.msra.mxu0 0.0
      %1161 = vmatprep.subr.mxu0 0.0
      %1162 = vmatpush1.msra.mxu0 0.0
      %1163 = vmatprep.subr.mxu0 0.0
      %1164 = vmatpush1.msra.mxu0 0.0
      %1165 = vmatprep.subr.mxu0 0.0
      %1166 = vmatpush1.msra.mxu0 0.0
      %1167 = vmatprep.subr.mxu0 0.0
      %1168 = vmatpush1.msra.mxu0 0.0
      %1169 = vmatprep.subr.mxu0 0.0
      %1170 = vmatpush1.msra.mxu0 0.0
      %1171 = vmatprep.subr.mxu0 0.0
      %1172 = vmatpush1.msra.mxu0 0.0
      %1173 = vmatprep.subr.mxu0 0.0
      %1174 = vmatpush1.msra.mxu0 0.0
      %1175 = vmatprep.subr.mxu0 0.0
      %1176 = vmatpush1.msra.mxu0 0.0
      %1177 = vmatprep.subr.mxu0 0.0
      %1178 = vmatpush1.msra.mxu0 0.0
      %1179 = vmatprep.subr.mxu0 0.0
      %1180 = vmatpush1.msra.mxu0 0.0
      %1181 = vmatprep.subr.mxu0 0.0
      %1182 = vmatpush1.msra.mxu0 0.0
      %1183 = vmatprep.subr.mxu0 0.0
      %1184 = vmatpush1.msra.mxu0 0.0
      %1185 = vmatprep.mubr.f32.mxu0 0.0
      %1186 = vmatmul.mubr.f32.gmra.mrb[0].mxu0 %v1119
      %v1187 = vpop.f32.mrb[0].mxu0
      %v1188 = vadd.f32 0.0, %v1187
      %v1189 = vpop.f32.mrb[0].mxu0
      %v1190 = vadd.f32 0.0, %v1189
      %1191 = vdwg.mxu0
      %1192 = vmatprep.subr.mxu0 0.0
      %1193 = vmatpush1.msra.mxu0 %v1111
      %1194 = vmatprep.subr.mxu0 0.0
      %1195 = vmatpush1.msra.mxu0 0.0
      %1196 = vmatprep.subr.mxu0 0.0
      %1197 = vmatpush1.msra.mxu0 0.0
      %1198 = vmatprep.subr.mxu0 0.0
      %1199 = vmatpush1.msra.mxu0 0.0
      %1200 = vmatprep.subr.mxu0 0.0
      %1201 = vmatpush1.msra.mxu0 0.0
      %1202 = vmatprep.subr.mxu0 0.0
      %1203 = vmatpush1.msra.mxu0 0.0
      %1204 = vmatprep.subr.mxu0 0.0
      %1205 = vmatpush1.msra.mxu0 0.0
      %1206 = vmatprep.subr.mxu0 0.0
      %1207 = vmatpush1.msra.mxu0 0.0
      %1208 = vmatprep.subr.mxu0 0.0
      %1209 = vmatpush1.msra.mxu0 0.0
      %1210 = vmatprep.subr.mxu0 0.0
      %1211 = vmatpush1.msra.mxu0 0.0
      %1212 = vmatprep.subr.mxu0 0.0
      %1213 = vmatpush1.msra.mxu0 0.0
      %1214 = vmatprep.subr.mxu0 0.0
      %1215 = vmatpush1.msra.mxu0 0.0
      %1216 = vmatprep.subr.mxu0 0.0
      %1217 = vmatpush1.msra.mxu0 0.0
      %1218 = vmatprep.subr.mxu0 0.0
      %1219 = vmatpush1.msra.mxu0 0.0
      %1220 = vmatprep.subr.mxu0 0.0
      %1221 = vmatpush1.msra.mxu0 0.0
      %1222 = vmatprep.subr.mxu0 0.0
      %1223 = vmatpush1.msra.mxu0 0.0
      %1224 = vmatprep.subr.mxu0 0.0
      %1225 = vmatpush1.msra.mxu0 0.0
      %1226 = vmatprep.subr.mxu0 0.0
      %1227 = vmatpush1.msra.mxu0 0.0
      %1228 = vmatprep.subr.mxu0 0.0
      %1229 = vmatpush1.msra.mxu0 0.0
      %1230 = vmatprep.subr.mxu0 0.0
      %1231 = vmatpush1.msra.mxu0 0.0
      %1232 = vmatprep.subr.mxu0 0.0
      %1233 = vmatpush1.msra.mxu0 0.0
      %1234 = vmatprep.subr.mxu0 0.0
      %1235 = vmatpush1.msra.mxu0 0.0
      %1236 = vmatprep.subr.mxu0 0.0
      %1237 = vmatpush1.msra.mxu0 0.0
      %1238 = vmatprep.subr.mxu0 0.0
      %1239 = vmatpush1.msra.mxu0 0.0
      %1240 = vmatprep.subr.mxu0 0.0
      %1241 = vmatpush1.msra.mxu0 0.0
      %1242 = vmatprep.subr.mxu0 0.0
      %1243 = vmatpush1.msra.mxu0 0.0
      %1244 = vmatprep.subr.mxu0 0.0
      %1245 = vmatpush1.msra.mxu0 0.0
      %1246 = vmatprep.subr.mxu0 0.0
      %1247 = vmatpush1.msra.mxu0 0.0
      %1248 = vmatprep.subr.mxu0 0.0
      %1249 = vmatpush1.msra.mxu0 0.0
      %1250 = vmatprep.subr.mxu0 0.0
      %1251 = vmatpush1.msra.mxu0 0.0
      %1252 = vmatprep.subr.mxu0 0.0
      %1253 = vmatpush1.msra.mxu0 0.0
      %1254 = vmatprep.subr.mxu0 0.0
      %1255 = vmatpush1.msra.mxu0 0.0
      %1256 = vmatprep.mubr.f32.mxu0 0.0
      %1257 = vmatmul.mubr.f32.gmra.mrb[0].mxu0 %v1119
      %v1258 = vpop.f32.mrb[0].mxu0
      %v1259 = vadd.f32 0.0, %v1258
      %v1260 = vpop.f32.mrb[0].mxu0
      %1261 = vdwg.mxu0
      %v1262 = vadd.f32 %v1101, %v1188
      %v1263 = vadd.f32 %v1102, %v1190
      %v1264 = vadd.f32 %v1103, %v1259
      %s1265 = scalar_lea.vmem %s1, 48
      %v1266 = vld [vmem:[%s1265] sm:$0xff]
      %1267 = vrot.lane.b32.xlu0 %v311, 92
      %v1268 = vpop.permute.xlu0 %1267
      %1269 = vrot.lane.b32.xlu0 %v312, 92
      %v1270 = vpop.permute.xlu0 %1269
      %1271 = vrot.lane.b32.xlu0 %v313, 92
      %v1272 = vpop.permute.xlu0 %1271
      %vm1273 = vcmask 752640
      %v1274 = vsel %vm1273, %v1268, %v1270
      %v1275 = vsel %vm1273, %v1270, %v1272
      %v1280 = vsel %vm332, %v1266, 0
      %1282 = vmatprep.subr.mxu0 %v1275
      %1283 = vmatpush1.msra.mxu0 %v1274
      %1284 = vmatprep.subr.mxu0 0.0
      %1285 = vmatpush1.msra.mxu0 0.0
      %1286 = vmatprep.subr.mxu0 0.0
      %1287 = vmatpush1.msra.mxu0 0.0
      %1288 = vmatprep.subr.mxu0 0.0
      %1289 = vmatpush1.msra.mxu0 0.0
      %1290 = vmatprep.subr.mxu0 0.0
      %1291 = vmatpush1.msra.mxu0 0.0
      %1292 = vmatprep.subr.mxu0 0.0
      %1293 = vmatpush1.msra.mxu0 0.0
      %1294 = vmatprep.subr.mxu0 0.0
      %1295 = vmatpush1.msra.mxu0 0.0
      %1296 = vmatprep.subr.mxu0 0.0
      %1297 = vmatpush1.msra.mxu0 0.0
      %1298 = vmatprep.subr.mxu0 0.0
      %1299 = vmatpush1.msra.mxu0 0.0
      %1300 = vmatprep.subr.mxu0 0.0
      %1301 = vmatpush1.msra.mxu0 0.0
      %1302 = vmatprep.subr.mxu0 0.0
      %1303 = vmatpush1.msra.mxu0 0.0
      %1304 = vmatprep.subr.mxu0 0.0
      %1305 = vmatpush1.msra.mxu0 0.0
      %1306 = vmatprep.subr.mxu0 0.0
      %1307 = vmatpush1.msra.mxu0 0.0
      %1308 = vmatprep.subr.mxu0 0.0
      %1309 = vmatpush1.msra.mxu0 0.0
      %1310 = vmatprep.subr.mxu0 0.0
      %1311 = vmatpush1.msra.mxu0 0.0
      %1312 = vmatprep.subr.mxu0 0.0
      %1313 = vmatpush1.msra.mxu0 0.0
      %1314 = vmatprep.subr.mxu0 0.0
      %1315 = vmatpush1.msra.mxu0 0.0
      %1316 = vmatprep.subr.mxu0 0.0
      %1317 = vmatpush1.msra.mxu0 0.0
      %1318 = vmatprep.subr.mxu0 0.0
      %1319 = vmatpush1.msra.mxu0 0.0
      %1320 = vmatprep.subr.mxu0 0.0
      %1321 = vmatpush1.msra.mxu0 0.0
      %1322 = vmatprep.subr.mxu0 0.0
      %1323 = vmatpush1.msra.mxu0 0.0
      %1324 = vmatprep.subr.mxu0 0.0
      %1325 = vmatpush1.msra.mxu0 0.0
      %1326 = vmatprep.subr.mxu0 0.0
      %1327 = vmatpush1.msra.mxu0 0.0
      %1328 = vmatprep.subr.mxu0 0.0
      %1329 = vmatpush1.msra.mxu0 0.0
      %1330 = vmatprep.subr.mxu0 0.0
      %1331 = vmatpush1.msra.mxu0 0.0
      %1332 = vmatprep.subr.mxu0 0.0
      %1333 = vmatpush1.msra.mxu0 0.0
      %1334 = vmatprep.subr.mxu0 0.0
      %1335 = vmatpush1.msra.mxu0 0.0
      %1336 = vmatprep.subr.mxu0 0.0
      %1337 = vmatpush1.msra.mxu0 0.0
      %1338 = vmatprep.subr.mxu0 0.0
      %1339 = vmatpush1.msra.mxu0 0.0
      %1340 = vmatprep.subr.mxu0 0.0
      %1341 = vmatpush1.msra.mxu0 0.0
      %1342 = vmatprep.subr.mxu0 0.0
      %1343 = vmatpush1.msra.mxu0 0.0
      %1344 = vmatprep.subr.mxu0 0.0
      %1345 = vmatpush1.msra.mxu0 0.0
      %1346 = vmatprep.mubr.f32.mxu0 0.0
      %1347 = vmatmul.mubr.f32.gmra.mrb[0].mxu0 %v1280
      %v1348 = vpop.f32.mrb[0].mxu0
      %v1349 = vadd.f32 0.0, %v1348
      %v1350 = vpop.f32.mrb[0].mxu0
      %v1351 = vadd.f32 0.0, %v1350
      %1352 = vdwg.mxu0
      %1353 = vmatprep.subr.mxu0 0.0
      %1354 = vmatpush1.msra.mxu0 %v1272
      %1355 = vmatprep.subr.mxu0 0.0
      %1356 = vmatpush1.msra.mxu0 0.0
      %1357 = vmatprep.subr.mxu0 0.0
      %1358 = vmatpush1.msra.mxu0 0.0
      %1359 = vmatprep.subr.mxu0 0.0
      %1360 = vmatpush1.msra.mxu0 0.0
      %1361 = vmatprep.subr.mxu0 0.0
      %1362 = vmatpush1.msra.mxu0 0.0
      %1363 = vmatprep.subr.mxu0 0.0
      %1364 = vmatpush1.msra.mxu0 0.0
      %1365 = vmatprep.subr.mxu0 0.0
      %1366 = vmatpush1.msra.mxu0 0.0
      %1367 = vmatprep.subr.mxu0 0.0
      %1368 = vmatpush1.msra.mxu0 0.0
      %1369 = vmatprep.subr.mxu0 0.0
      %1370 = vmatpush1.msra.mxu0 0.0
      %1371 = vmatprep.subr.mxu0 0.0
      %1372 = vmatpush1.msra.mxu0 0.0
      %1373 = vmatprep.subr.mxu0 0.0
      %1374 = vmatpush1.msra.mxu0 0.0
      %1375 = vmatprep.subr.mxu0 0.0
      %1376 = vmatpush1.msra.mxu0 0.0
      %1377 = vmatprep.subr.mxu0 0.0
      %1378 = vmatpush1.msra.mxu0 0.0
      %1379 = vmatprep.subr.mxu0 0.0
      %1380 = vmatpush1.msra.mxu0 0.0
      %1381 = vmatprep.subr.mxu0 0.0
      %1382 = vmatpush1.msra.mxu0 0.0
      %1383 = vmatprep.subr.mxu0 0.0
      %1384 = vmatpush1.msra.mxu0 0.0
      %1385 = vmatprep.subr.mxu0 0.0
      %1386 = vmatpush1.msra.mxu0 0.0
      %1387 = vmatprep.subr.mxu0 0.0
      %1388 = vmatpush1.msra.mxu0 0.0
      %1389 = vmatprep.subr.mxu0 0.0
      %1390 = vmatpush1.msra.mxu0 0.0
      %1391 = vmatprep.subr.mxu0 0.0
      %1392 = vmatpush1.msra.mxu0 0.0
      %1393 = vmatprep.subr.mxu0 0.0
      %1394 = vmatpush1.msra.mxu0 0.0
      %1395 = vmatprep.subr.mxu0 0.0
      %1396 = vmatpush1.msra.mxu0 0.0
      %1397 = vmatprep.subr.mxu0 0.0
      %1398 = vmatpush1.msra.mxu0 0.0
      %1399 = vmatprep.subr.mxu0 0.0
      %1400 = vmatpush1.msra.mxu0 0.0
      %1401 = vmatprep.subr.mxu0 0.0
      %1402 = vmatpush1.msra.mxu0 0.0
      %1403 = vmatprep.subr.mxu0 0.0
      %1404 = vmatpush1.msra.mxu0 0.0
      %1405 = vmatprep.subr.mxu0 0.0
      %1406 = vmatpush1.msra.mxu0 0.0
      %1407 = vmatprep.subr.mxu0 0.0
      %1408 = vmatpush1.msra.mxu0 0.0
      %1409 = vmatprep.subr.mxu0 0.0
      %1410 = vmatpush1.msra.mxu0 0.0
      %1411 = vmatprep.subr.mxu0 0.0
      %1412 = vmatpush1.msra.mxu0 0.0
      %1413 = vmatprep.subr.mxu0 0.0
      %1414 = vmatpush1.msra.mxu0 0.0
      %1415 = vmatprep.subr.mxu0 0.0
      %1416 = vmatpush1.msra.mxu0 0.0
      %1417 = vmatprep.mubr.f32.mxu0 0.0
      %1418 = vmatmul.mubr.f32.gmra.mrb[0].mxu0 %v1280
      %v1419 = vpop.f32.mrb[0].mxu0
      %v1420 = vadd.f32 0.0, %v1419
      %v1421 = vpop.f32.mrb[0].mxu0
      %1422 = vdwg.mxu0
      %v1423 = vadd.f32 %v1262, %v1349
      %v1424 = vadd.f32 %v1263, %v1351
      %v1425 = vadd.f32 %v1264, %v1420
      %s1426 = scalar_lea.vmem %s1, 56
      %v1427 = vld [vmem:[%s1426] sm:$0xff]
      %1428 = vrot.lane.b32.xlu0 %v311, 91
      %v1429 = vpop.permute.xlu0 %1428
      %1430 = vrot.lane.b32.xlu0 %v312, 91
      %v1431 = vpop.permute.xlu0 %1430
      %1432 = vrot.lane.b32.xlu0 %v313, 91
      %v1433 = vpop.permute.xlu0 %1432
      %vm1434 = vcmask 744448
      %v1435 = vsel %vm1434, %v1429, %v1431
      %v1436 = vsel %vm1434, %v1431, %v1433
      %v1441 = vsel %vm332, %v1427, 0
      %1443 = vmatprep.subr.mxu0 %v1436
      %1444 = vmatpush1.msra.mxu0 %v1435
      %1445 = vmatprep.subr.mxu0 0.0
      %1446 = vmatpush1.msra.mxu0 0.0
      %1447 = vmatprep.subr.mxu0 0.0
      %1448 = vmatpush1.msra.mxu0 0.0
      %1449 = vmatprep.subr.mxu0 0.0
      %1450 = vmatpush1.msra.mxu0 0.0
      %1451 = vmatprep.subr.mxu0 0.0
      %1452 = vmatpush1.msra.mxu0 0.0
      %1453 = vmatprep.subr.mxu0 0.0
      %1454 = vmatpush1.msra.mxu0 0.0
      %1455 = vmatprep.subr.mxu0 0.0
      %1456 = vmatpush1.msra.mxu0 0.0
      %1457 = vmatprep.subr.mxu0 0.0
      %1458 = vmatpush1.msra.mxu0 0.0
      %1459 = vmatprep.subr.mxu0 0.0
      %1460 = vmatpush1.msra.mxu0 0.0
      %1461 = vmatprep.subr.mxu0 0.0
      %1462 = vmatpush1.msra.mxu0 0.0
      %1463 = vmatprep.subr.mxu0 0.0
      %1464 = vmatpush1.msra.mxu0 0.0
      %1465 = vmatprep.subr.mxu0 0.0
      %1466 = vmatpush1.msra.mxu0 0.0
      %1467 = vmatprep.subr.mxu0 0.0
      %1468 = vmatpush1.msra.mxu0 0.0
      %1469 = vmatprep.subr.mxu0 0.0
      %1470 = vmatpush1.msra.mxu0 0.0
      %1471 = vmatprep.subr.mxu0 0.0
      %1472 = vmatpush1.msra.mxu0 0.0
      %1473 = vmatprep.subr.mxu0 0.0
      %1474 = vmatpush1.msra.mxu0 0.0
      %1475 = vmatprep.subr.mxu0 0.0
      %1476 = vmatpush1.msra.mxu0 0.0
      %1477 = vmatprep.subr.mxu0 0.0
      %1478 = vmatpush1.msra.mxu0 0.0
      %1479 = vmatprep.subr.mxu0 0.0
      %1480 = vmatpush1.msra.mxu0 0.0
      %1481 = vmatprep.subr.mxu0 0.0
      %1482 = vmatpush1.msra.mxu0 0.0
      %1483 = vmatprep.subr.mxu0 0.0
      %1484 = vmatpush1.msra.mxu0 0.0
      %1485 = vmatprep.subr.mxu0 0.0
      %1486 = vmatpush1.msra.mxu0 0.0
      %1487 = vmatprep.subr.mxu0 0.0
      %1488 = vmatpush1.msra.mxu0 0.0
      %1489 = vmatprep.subr.mxu0 0.0
      %1490 = vmatpush1.msra.mxu0 0.0
      %1491 = vmatprep.subr.mxu0 0.0
      %1492 = vmatpush1.msra.mxu0 0.0
      %1493 = vmatprep.subr.mxu0 0.0
      %1494 = vmatpush1.msra.mxu0 0.0
      %1495 = vmatprep.subr.mxu0 0.0
      %1496 = vmatpush1.msra.mxu0 0.0
      %1497 = vmatprep.subr.mxu0 0.0
      %1498 = vmatpush1.msra.mxu0 0.0
      %1499 = vmatprep.subr.mxu0 0.0
      %1500 = vmatpush1.msra.mxu0 0.0
      %1501 = vmatprep.subr.mxu0 0.0
      %1502 = vmatpush1.msra.mxu0 0.0
      %1503 = vmatprep.subr.mxu0 0.0
      %1504 = vmatpush1.msra.mxu0 0.0
      %1505 = vmatprep.subr.mxu0 0.0
      %1506 = vmatpush1.msra.mxu0 0.0
      %1507 = vmatprep.mubr.f32.mxu0 0.0
      %1508 = vmatmul.mubr.f32.gmra.mrb[0].mxu0 %v1441
      %v1509 = vpop.f32.mrb[0].mxu0
      %v1510 = vadd.f32 0.0, %v1509
      %v1511 = vpop.f32.mrb[0].mxu0
      %v1512 = vadd.f32 0.0, %v1511
      %1513 = vdwg.mxu0
      %1514 = vmatprep.subr.mxu0 0.0
      %1515 = vmatpush1.msra.mxu0 %v1433
      %1516 = vmatprep.subr.mxu0 0.0
      %1517 = vmatpush1.msra.mxu0 0.0
      %1518 = vmatprep.subr.mxu0 0.0
      %1519 = vmatpush1.msra.mxu0 0.0
      %1520 = vmatprep.subr.mxu0 0.0
      %1521 = vmatpush1.msra.mxu0 0.0
      %1522 = vmatprep.subr.mxu0 0.0
      %1523 = vmatpush1.msra.mxu0 0.0
      %1524 = vmatprep.subr.mxu0 0.0
      %1525 = vmatpush1.msra.mxu0 0.0
      %1526 = vmatprep.subr.mxu0 0.0
      %1527 = vmatpush1.msra.mxu0 0.0
      %1528 = vmatprep.subr.mxu0 0.0
      %1529 = vmatpush1.msra.mxu0 0.0
      %1530 = vmatprep.subr.mxu0 0.0
      %1531 = vmatpush1.msra.mxu0 0.0
      %1532 = vmatprep.subr.mxu0 0.0
      %1533 = vmatpush1.msra.mxu0 0.0
      %1534 = vmatprep.subr.mxu0 0.0
      %1535 = vmatpush1.msra.mxu0 0.0
      %1536 = vmatprep.subr.mxu0 0.0
      %1537 = vmatpush1.msra.mxu0 0.0
      %1538 = vmatprep.subr.mxu0 0.0
      %1539 = vmatpush1.msra.mxu0 0.0
      %1540 = vmatprep.subr.mxu0 0.0
      %1541 = vmatpush1.msra.mxu0 0.0
      %1542 = vmatprep.subr.mxu0 0.0
      %1543 = vmatpush1.msra.mxu0 0.0
      %1544 = vmatprep.subr.mxu0 0.0
      %1545 = vmatpush1.msra.mxu0 0.0
      %1546 = vmatprep.subr.mxu0 0.0
      %1547 = vmatpush1.msra.mxu0 0.0
      %1548 = vmatprep.subr.mxu0 0.0
      %1549 = vmatpush1.msra.mxu0 0.0
      %1550 = vmatprep.subr.mxu0 0.0
      %1551 = vmatpush1.msra.mxu0 0.0
      %1552 = vmatprep.subr.mxu0 0.0
      %1553 = vmatpush1.msra.mxu0 0.0
      %1554 = vmatprep.subr.mxu0 0.0
      %1555 = vmatpush1.msra.mxu0 0.0
      %1556 = vmatprep.subr.mxu0 0.0
      %1557 = vmatpush1.msra.mxu0 0.0
      %1558 = vmatprep.subr.mxu0 0.0
      %1559 = vmatpush1.msra.mxu0 0.0
      %1560 = vmatprep.subr.mxu0 0.0
      %1561 = vmatpush1.msra.mxu0 0.0
      %1562 = vmatprep.subr.mxu0 0.0
      %1563 = vmatpush1.msra.mxu0 0.0
      %1564 = vmatprep.subr.mxu0 0.0
      %1565 = vmatpush1.msra.mxu0 0.0
      %1566 = vmatprep.subr.mxu0 0.0
      %1567 = vmatpush1.msra.mxu0 0.0
      %1568 = vmatprep.subr.mxu0 0.0
      %1569 = vmatpush1.msra.mxu0 0.0
      %1570 = vmatprep.subr.mxu0 0.0
      %1571 = vmatpush1.msra.mxu0 0.0
      %1572 = vmatprep.subr.mxu0 0.0
      %1573 = vmatpush1.msra.mxu0 0.0
      %1574 = vmatprep.subr.mxu0 0.0
      %1575 = vmatpush1.msra.mxu0 0.0
      %1576 = vmatprep.subr.mxu0 0.0
      %1577 = vmatpush1.msra.mxu0 0.0
      %1578 = vmatprep.mubr.f32.mxu0 0.0
      %1579 = vmatmul.mubr.f32.gmra.mrb[0].mxu0 %v1441
      %v1580 = vpop.f32.mrb[0].mxu0
      %v1581 = vadd.f32 0.0, %v1580
      %v1582 = vpop.f32.mrb[0].mxu0
      %1583 = vdwg.mxu0
      %v1584 = vadd.f32 %v1423, %v1510
      %v1585 = vadd.f32 %v1424, %v1512
      %v1586 = vadd.f32 %v1425, %v1581
      %s1587 = scalar_lea.vmem %s1, 64
      %v1588 = vld [vmem:[%s1587] sm:$0xff]
      %1589 = vrot.lane.b32.xlu0 %v311, 90
      %v1590 = vpop.permute.xlu0 %1589
      %1591 = vrot.lane.b32.xlu0 %v312, 90
      %v1592 = vpop.permute.xlu0 %1591
      %1593 = vrot.lane.b32.xlu0 %v313, 90
      %v1594 = vpop.permute.xlu0 %1593
      %vm1595 = vcmask 736256
      %v1596 = vsel %vm1595, %v1590, %v1592
      %v1597 = vsel %vm1595, %v1592, %v1594
      %v1602 = vsel %vm332, %v1588, 0
      %1604 = vmatprep.subr.mxu0 %v1597
      %1605 = vmatpush1.msra.mxu0 %v1596
      %1606 = vmatprep.subr.mxu0 0.0
      %1607 = vmatpush1.msra.mxu0 0.0
      %1608 = vmatprep.subr.mxu0 0.0
      %1609 = vmatpush1.msra.mxu0 0.0
      %1610 = vmatprep.subr.mxu0 0.0
      %1611 = vmatpush1.msra.mxu0 0.0
      %1612 = vmatprep.subr.mxu0 0.0
      %1613 = vmatpush1.msra.mxu0 0.0
      %1614 = vmatprep.subr.mxu0 0.0
      %1615 = vmatpush1.msra.mxu0 0.0
      %1616 = vmatprep.subr.mxu0 0.0
      %1617 = vmatpush1.msra.mxu0 0.0
      %1618 = vmatprep.subr.mxu0 0.0
      %1619 = vmatpush1.msra.mxu0 0.0
      %1620 = vmatprep.subr.mxu0 0.0
      %1621 = vmatpush1.msra.mxu0 0.0
      %1622 = vmatprep.subr.mxu0 0.0
      %1623 = vmatpush1.msra.mxu0 0.0
      %1624 = vmatprep.subr.mxu0 0.0
      %1625 = vmatpush1.msra.mxu0 0.0
      %1626 = vmatprep.subr.mxu0 0.0
      %1627 = vmatpush1.msra.mxu0 0.0
      %1628 = vmatprep.subr.mxu0 0.0
      %1629 = vmatpush1.msra.mxu0 0.0
      %1630 = vmatprep.subr.mxu0 0.0
      %1631 = vmatpush1.msra.mxu0 0.0
      %1632 = vmatprep.subr.mxu0 0.0
      %1633 = vmatpush1.msra.mxu0 0.0
      %1634 = vmatprep.subr.mxu0 0.0
      %1635 = vmatpush1.msra.mxu0 0.0
      %1636 = vmatprep.subr.mxu0 0.0
      %1637 = vmatpush1.msra.mxu0 0.0
      %1638 = vmatprep.subr.mxu0 0.0
      %1639 = vmatpush1.msra.mxu0 0.0
      %1640 = vmatprep.subr.mxu0 0.0
      %1641 = vmatpush1.msra.mxu0 0.0
      %1642 = vmatprep.subr.mxu0 0.0
      %1643 = vmatpush1.msra.mxu0 0.0
      %1644 = vmatprep.subr.mxu0 0.0
      %1645 = vmatpush1.msra.mxu0 0.0
      %1646 = vmatprep.subr.mxu0 0.0
      %1647 = vmatpush1.msra.mxu0 0.0
      %1648 = vmatprep.subr.mxu0 0.0
      %1649 = vmatpush1.msra.mxu0 0.0
      %1650 = vmatprep.subr.mxu0 0.0
      %1651 = vmatpush1.msra.mxu0 0.0
      %1652 = vmatprep.subr.mxu0 0.0
      %1653 = vmatpush1.msra.mxu0 0.0
      %1654 = vmatprep.subr.mxu0 0.0
      %1655 = vmatpush1.msra.mxu0 0.0
      %1656 = vmatprep.subr.mxu0 0.0
      %1657 = vmatpush1.msra.mxu0 0.0
      %1658 = vmatprep.subr.mxu0 0.0
      %1659 = vmatpush1.msra.mxu0 0.0
      %1660 = vmatprep.subr.mxu0 0.0
      %1661 = vmatpush1.msra.mxu0 0.0
      %1662 = vmatprep.subr.mxu0 0.0
      %1663 = vmatpush1.msra.mxu0 0.0
      %1664 = vmatprep.subr.mxu0 0.0
      %1665 = vmatpush1.msra.mxu0 0.0
      %1666 = vmatprep.subr.mxu0 0.0
      %1667 = vmatpush1.msra.mxu0 0.0
      %1668 = vmatprep.mubr.f32.mxu0 0.0
      %1669 = vmatmul.mubr.f32.gmra.mrb[0].mxu0 %v1602
      %v1670 = vpop.f32.mrb[0].mxu0
      %v1671 = vadd.f32 0.0, %v1670
      %v1672 = vpop.f32.mrb[0].mxu0
      %v1673 = vadd.f32 0.0, %v1672
      %1674 = vdwg.mxu0
      %1675 = vmatprep.subr.mxu0 0.0
      %1676 = vmatpush1.msra.mxu0 %v1594
      %1677 = vmatprep.subr.mxu0 0.0
      %1678 = vmatpush1.msra.mxu0 0.0
      %1679 = vmatprep.subr.mxu0 0.0
      %1680 = vmatpush1.msra.mxu0 0.0
      %1681 = vmatprep.subr.mxu0 0.0
      %1682 = vmatpush1.msra.mxu0 0.0
      %1683 = vmatprep.subr.mxu0 0.0
      %1684 = vmatpush1.msra.mxu0 0.0
      %1685 = vmatprep.subr.mxu0 0.0
      %1686 = vmatpush1.msra.mxu0 0.0
      %1687 = vmatprep.subr.mxu0 0.0
      %1688 = vmatpush1.msra.mxu0 0.0
      %1689 = vmatprep.subr.mxu0 0.0
      %1690 = vmatpush1.msra.mxu0 0.0
      %1691 = vmatprep.subr.mxu0 0.0
      %1692 = vmatpush1.msra.mxu0 0.0
      %1693 = vmatprep.subr.mxu0 0.0
      %1694 = vmatpush1.msra.mxu0 0.0
      %1695 = vmatprep.subr.mxu0 0.0
      %1696 = vmatpush1.msra.mxu0 0.0
      %1697 = vmatprep.subr.mxu0 0.0
      %1698 = vmatpush1.msra.mxu0 0.0
      %1699 = vmatprep.subr.mxu0 0.0
      %1700 = vmatpush1.msra.mxu0 0.0
      %1701 = vmatprep.subr.mxu0 0.0
      %1702 = vmatpush1.msra.mxu0 0.0
      %1703 = vmatprep.subr.mxu0 0.0
      %1704 = vmatpush1.msra.mxu0 0.0
      %1705 = vmatprep.subr.mxu0 0.0
      %1706 = vmatpush1.msra.mxu0 0.0
      %1707 = vmatprep.subr.mxu0 0.0
      %1708 = vmatpush1.msra.mxu0 0.0
      %1709 = vmatprep.subr.mxu0 0.0
      %1710 = vmatpush1.msra.mxu0 0.0
      %1711 = vmatprep.subr.mxu0 0.0
      %1712 = vmatpush1.msra.mxu0 0.0
      %1713 = vmatprep.subr.mxu0 0.0
      %1714 = vmatpush1.msra.mxu0 0.0
      %1715 = vmatprep.subr.mxu0 0.0
      %1716 = vmatpush1.msra.mxu0 0.0
      %1717 = vmatprep.subr.mxu0 0.0
      %1718 = vmatpush1.msra.mxu0 0.0
      %1719 = vmatprep.subr.mxu0 0.0
      %1720 = vmatpush1.msra.mxu0 0.0
      %1721 = vmatprep.subr.mxu0 0.0
      %1722 = vmatpush1.msra.mxu0 0.0
      %1723 = vmatprep.subr.mxu0 0.0
      %1724 = vmatpush1.msra.mxu0 0.0
      %1725 = vmatprep.subr.mxu0 0.0
      %1726 = vmatpush1.msra.mxu0 0.0
      %1727 = vmatprep.subr.mxu0 0.0
      %1728 = vmatpush1.msra.mxu0 0.0
      %1729 = vmatprep.subr.mxu0 0.0
      %1730 = vmatpush1.msra.mxu0 0.0
      %1731 = vmatprep.subr.mxu0 0.0
      %1732 = vmatpush1.msra.mxu0 0.0
      %1733 = vmatprep.subr.mxu0 0.0
      %1734 = vmatpush1.msra.mxu0 0.0
      %1735 = vmatprep.subr.mxu0 0.0
      %1736 = vmatpush1.msra.mxu0 0.0
      %1737 = vmatprep.subr.mxu0 0.0
      %1738 = vmatpush1.msra.mxu0 0.0
      %1739 = vmatprep.mubr.f32.mxu0 0.0
      %1740 = vmatmul.mubr.f32.gmra.mrb[0].mxu0 %v1602
      %v1741 = vpop.f32.mrb[0].mxu0
      %v1742 = vadd.f32 0.0, %v1741
      %v1743 = vpop.f32.mrb[0].mxu0
      %1744 = vdwg.mxu0
      %v1745 = vadd.f32 %v1584, %v1671
      %v1746 = vadd.f32 %v1585, %v1673
      %v1747 = vadd.f32 %v1586, %v1742
      %v1748 = vld [vmem:[%s2] sm:$0xff]
      %1750 = vset.pattern.permute.xlu0 0
      %1751 = vperm.xlu0 %1750, %v1748
      %v1752 = vpop.permute.xlu0 %1751
      %v1754 = vadd.f32 %v1745, %v1752
      %v1755 = vadd.f32 %v1746, %v1752
      %v1756 = vadd.f32 %v1747, %v1752
      %1757 = vst [vmem:[%s170] sm:$0xff] %v1754
      %1758 = vst [vmem:[%s170 + $0x8] sm:$0xff] %v1755
      %vm1759 = vcmask 261120
      %1760 = vst.msk [vmem:[%s170 + $0x10] sm:$0xff] %vm1759, %v1756
      %p1761 = scmp.lt.s32.totalorder %s14, 1
      %s1762 = scalar_select %p1761, %s14, 1
      %s1763 = smul.addr %s1762, 3
      %s1764 = smul.addr %s1763, 8
      %s1765 = scalar_lea.vmem %s3, %s1764
      // Predicated region
      $region33: #{coord_conv.1} parent=31 // pred_check
        %p1766 = pneg %p100
      $region34: #{coord_conv.1} parent=31 // pred_check_branch
        %1768 = sbr.rel (%p1766) target = $region36
      $region35: #{coord_conv.1} parent=31 // pred_region
        _
      $region36: #{coord_conv.1} parent=31 // pred_fallthru
        _
    $region32: #{coord_conv.1} parent=5 // pred_fallthru
      _
    %p1769 = scmp.le.s32.totalorder 2, %s9
    // Predicated region
    $region37: #{coord_conv.1} parent=5 // pred_check
      %p1770 = pneg %p1769
    $region38: #{coord_conv.1} parent=5 // pred_check_branch
      %1772 = sbr.rel (%p1770) target = $region40
    $region39: #{coord_conv.1} parent=5 // pred_region
      %s1773 = ssub.s32 %s9, 2
      // Predicated region
      $region41: #{coord_conv.1} parent=39 // pred_check
        %p1774 = pneg %p106
      $region42: #{coord_conv.1} parent=39 // pred_check_branch
        %1776 = sbr.rel (%p1774) target = $region44
      $region43: #{coord_conv.1} parent=39 // pred_region
        %p1777 = scmp.lt.s32.totalorder %s15, 1
        %s1778 = scalar_select %p1777, %s15, 1
        %s1779 = smul.addr %s1778, 3
        %s1780 = smul.addr %s1779, 8
        %s1781 = scalar_lea.vmem %s3, %s1780
      $region44: #{coord_conv.1} parent=39 // pred_fallthru
        _
    $region40: #{coord_conv.1} parent=5 // pred_fallthru
      _
  $region6: #{coord_conv.1} parent=0 // loop_footer
    %s13 = sadd.s32 1, %s9
  $region7: #{coord_conv.1} parent=0 // loop_footer_branch
    %8 = sbr.rel target = $region3
  $region8: #{coord_conv.1} parent=0 // loop_exit
    _

</llo_original>
